<compile_context>
chip_gen: v7x
topology: tpu7x:2x2x1
jax: 0.10.0
libtpu: 0.0.40
codegen_flags: <defaults>
</compile_context>

<pallas_src>
import math
import functools

import jax
import jax.numpy as jnp
from jax.experimental import pallas as pl
from jax.experimental.pallas import tpu as pltpu

EPSILON = 1e-8
LN_EPS = 1e-5
NEG_INF = -1e30  # exp() underflows to exactly 0.0 in f32; causal diagonal is never masked


# ----------------------------------------------------------------------------
# In-kernel helpers (pure jnp on VMEM-resident values)
# ----------------------------------------------------------------------------
def _layernorm(z, g, b):
    mean = jnp.mean(z, axis=-1, keepdims=True)
    zc = z - mean
    var = jnp.mean(zc * zc, axis=-1, keepdims=True)
    return zc * jax.lax.rsqrt(var + LN_EPS) * g + b


def _gelu_exact(x):
    # exact (erf-based) GELU, matching torch.nn.functional.gelu default
    return 0.5 * x * (1.0 + jax.lax.erf(x * 0.7071067811865476))


def _softplus(x):
    return jnp.maximum(x, 0.0) + jnp.log1p(jnp.exp(-jnp.abs(x)))


# ----------------------------------------------------------------------------
# Kernel 1: input_to_hidden + positional encoding (fused epilogue)
# ----------------------------------------------------------------------------
def _embed_kernel(x_ref, w_ref, b_ref, pe_ref, o_ref):
    # x:(1,S,Fin) w:(Fin,H) b:(1,H) pe:(S,H) -> o:(1,S,H)
    h = jnp.dot(x_ref[0], w_ref[...], preferred_element_type=jnp.float32)
    o_ref[0] = h + b_ref[...] + pe_ref[...]


def pallas_embed(x, w, b, pe):
    B, S, Fin = x.shape
    H = w.shape[1]
    return pl.pallas_call(
        _embed_kernel,
        out_shape=jax.ShapeDtypeStruct((B, S, H), jnp.float32),
        grid=(B,),
        in_specs=[
            pl.BlockSpec((1, S, Fin), lambda i: (i, 0, 0)),
            pl.BlockSpec((Fin, H), lambda i: (0, 0)),
            pl.BlockSpec((1, H), lambda i: (0, 0)),
            pl.BlockSpec((S, H), lambda i: (0, 0)),
        ],
        out_specs=pl.BlockSpec((1, S, H), lambda i: (i, 0, 0)),
        compiler_params=pltpu.CompilerParams(dimension_semantics=("parallel",)),
    )(x, w, b, pe)


# ----------------------------------------------------------------------------
# Kernel 2: one fully-fused post-norm TransformerEncoderLayer (per batch element)
# ----------------------------------------------------------------------------
def _encoder_layer_kernel(h_ref,
                          w_qkv_ref, b_qkv_ref,
                          w_out_ref, b_out_ref,
                          ln1_g_ref, ln1_b_ref,
                          w_ff1_ref, b_ff1_ref,
                          w_ff2_ref, b_ff2_ref,
                          ln2_g_ref, ln2_b_ref,
                          o_ref, *, nhead, scale):
    x = h_ref[0]                                 # (S, H)
    S, H = x.shape
    Dh = H // nhead

    # --- QKV projection (single matmul) ---
    qkv = jnp.dot(x, w_qkv_ref[...], preferred_element_type=jnp.float32) \
        + b_qkv_ref[...]                          # (S, 3H) columns = [q | k | v]

    # --- causal mask, generated in-VMEM (no HBM mask tensor) ---
    rows = jax.lax.broadcasted_iota(jnp.int32, (S, S), 0)
    cols = jax.lax.broadcasted_iota(jnp.int32, (S, S), 1)
    causal = cols <= rows

    # --- per-head attention + fused out-projection accumulation ---
    w_out = w_out_ref[...]                        # (H, H)
    attn_proj = b_out_ref[...]                    # (1, H) broadcasts over S
    for hd in range(nhead):                       # nhead=2, static unroll
        lo = hd * Dh
        q = qkv[:, lo:lo + Dh]
        k = qkv[:, H + lo:H + lo + Dh]
        v = qkv[:, 2 * H + lo:2 * H + lo + Dh]
        s = jax.lax.dot_general(q, k, (((1,), (1,)), ((), ())),
                                preferred_element_type=jnp.float32) * scale
        s = jnp.where(causal, s, NEG_INF)
        m = jnp.max(s, axis=-1, keepdims=True)
        p = jnp.exp(s - m)
        denom = jnp.sum(p, axis=-1, keepdims=True)
        attn = p * pl.reciprocal(denom, approx=True)
        ho = jnp.dot(attn, v, preferred_element_type=jnp.float32)        # (S, Dh)
        # concat(heads) @ W_out  ==  sum_h head_h @ W_out[h*Dh:(h+1)*Dh]
        attn_proj = attn_proj + jnp.dot(ho, w_out[lo:lo + Dh, :],
                                        preferred_element_type=jnp.float32)

    # --- residual + LayerNorm 1 (post-norm) ---
    h1 = _layernorm(x + attn_proj, ln1_g_ref[...], ln1_b_ref[...])

    # --- feed forward (gelu) + residual + LayerNorm 2 ---
    ff = jnp.dot(h1, w_ff1_ref[...], preferred_element_type=jnp.float32) + b_ff1_ref[...]
    ff = _gelu_exact(ff)
    ff = jnp.dot(ff, w_ff2_ref[...], preferred_element_type=jnp.float32) + b_ff2_ref[...]
    o_ref[0] = _layernorm(h1 + ff, ln2_g_ref[...], ln2_b_ref[...])


def pallas_encoder_layer(h, lyr, nhead=2):
    B, S, H = h.shape
    Dh = H // nhead
    scale = 1.0 / math.sqrt(Dh)
    kernel = functools.partial(_encoder_layer_kernel, nhead=nhead, scale=scale)

    weights = [
        lyr["W_in_proj"], lyr["b_in_proj"],
        lyr["W_out_proj"], lyr["b_out_proj"],
        lyr["ln1_g"], lyr["ln1_b"],
        lyr["W_ff1"], lyr["b_ff1"],
        lyr["W_ff2"], lyr["b_ff2"],
        lyr["ln2_g"], lyr["ln2_b"],
    ]

    def _replicated(arr):
        return pl.BlockSpec(arr.shape, lambda i: (0, 0))

    in_specs = [pl.BlockSpec((1, S, H), lambda i: (i, 0, 0))]
    in_specs += [_replicated(w) for w in weights]

    return pl.pallas_call(
        kernel,
        out_shape=jax.ShapeDtypeStruct((B, S, H), jnp.float32),
        grid=(B,),
        in_specs=in_specs,
        out_specs=pl.BlockSpec((1, S, H), lambda i: (i, 0, 0)),
        compiler_params=pltpu.CompilerParams(dimension_semantics=("parallel",)),
    )(h, *weights)


# ----------------------------------------------------------------------------
# Kernel 3: fused hidden_to_z_params heads (loc: identity, scale: softplus), +EPSILON
# ----------------------------------------------------------------------------
def _heads_kernel(h_ref, wl_ref, bl_ref, ws_ref, bs_ref, loc_ref, scale_ref):
    x = h_ref[0]                                  # (S, H)
    loc = jnp.dot(x, wl_ref[...], preferred_element_type=jnp.float32) + bl_ref[...]
    loc_ref[0] = loc + EPSILON
    sc = jnp.dot(x, ws_ref[...], preferred_element_type=jnp.float32) + bs_ref[...]
    scale_ref[0] = _softplus(sc) + EPSILON


def pallas_heads(h, wl, bl, ws, bs):
    B, S, H = h.shape
    Z = wl.shape[1]
    return pl.pallas_call(
        _heads_kernel,
        out_shape=(jax.ShapeDtypeStruct((B, S, Z), jnp.float32),
                   jax.ShapeDtypeStruct((B, S, Z), jnp.float32)),
        grid=(B,),
        in_specs=[
            pl.BlockSpec((1, S, H), lambda i: (i, 0, 0)),
            pl.BlockSpec((H, Z), lambda i: (0, 0)),
            pl.BlockSpec((1, Z), lambda i: (0, 0)),
            pl.BlockSpec((H, Z), lambda i: (0, 0)),
            pl.BlockSpec((1, Z), lambda i: (0, 0)),
        ],
        out_specs=(pl.BlockSpec((1, S, Z), lambda i: (i, 0, 0)),
                   pl.BlockSpec((1, S, Z), lambda i: (i, 0, 0))),
        compiler_params=pltpu.CompilerParams(dimension_semantics=("parallel",)),
    )(h, wl, bl, ws, bs)


# ----------------------------------------------------------------------------
# Parameter setup (deterministic, synthetic) + forward glue
# ----------------------------------------------------------------------------
def positional_encoding(d_model, max_len=500):
    # NOTE: assumes even d_model (matches PyTorch module usage here, H=32)
    position = jnp.arange(max_len, dtype=jnp.float32)[:, None]
    div_term = jnp.exp(jnp.arange(0, d_model, 2, dtype=jnp.float32)
                       * (-math.log(10000.0) / d_model))
    pe = jnp.zeros((max_len, d_model), jnp.float32)
    pe = pe.at[:, 0::2].set(jnp.sin(position * div_term))
    pe = pe.at[:, 1::2].set(jnp.cos(position * div_term))
    return pe


def init_params(key, input_size, output_size, z_size, depth, max_len=500):
    H = output_size
    ks = iter(jax.random.split(key, 3 + 4 * depth))

    def w(shape):
        return jax.random.normal(next(ks), shape, jnp.float32) * 0.05

    p = {
        "W_ih": w((input_size, H)), "b_ih": jnp.zeros((1, H), jnp.float32),
        "W_loc": w((H, z_size)), "b_loc": jnp.zeros((1, z_size), jnp.float32),
        "W_scale": w((H, z_size)), "b_scale": jnp.zeros((1, z_size), jnp.float32),
        "pe": positional_encoding(H, max_len),
        "layers": [],
    }
    for _ in range(depth):
        p["layers"].append({
            "W_in_proj": w((H, 3 * H)), "b_in_proj": jnp.zeros((1, 3 * H), jnp.float32),
            "W_out_proj": w((H, H)), "b_out_proj": jnp.zeros((1, H), jnp.float32),
            "ln1_g": jnp.ones((1, H), jnp.float32), "ln1_b": jnp.zeros((1, H), jnp.float32),
            "W_ff1": w((H, H)), "b_ff1": jnp.zeros((1, H), jnp.float32),   # dim_ff = output_size
            "W_ff2": w((H, H)), "b_ff2": jnp.zeros((1, H), jnp.float32),
            "ln2_g": jnp.ones((1, H), jnp.float32), "ln2_b": jnp.zeros((1, H), jnp.float32),
        })
    return p


def transformer_link_forward(x, p, nhead=2):
    B, S, _ = x.shape
    pe = p["pe"][:S]                                       # (S, H) slice, trivial glue

    # x = input_to_hidden(x) + positional encoding  (fused)
    h = pallas_embed(x, p["W_ih"], p["b_ih"], pe)          # (B, S, H)

    # TransformerEncoder: depth x fully fused post-norm layers (causal mask in-kernel)
    for lyr in p["layers"]:
        h = pallas_encoder_layer(h, lyr, nhead=nhead)

    # params = {'loc': identity, 'scale': softplus}; each gets + EPSILON (fused heads)
    loc, scale = pallas_heads(h, p["W_loc"], p["b_loc"], p["W_scale"], p["b_scale"])
    return {"loc": loc, "scale": scale}


if __name__ == "__main__":
    B, S = 2, 8
    input_size, output_size, z_size, depth = 16, 32, 8, 2

    key = jax.random.PRNGKey(0)
    kx, kp = jax.random.split(key)
    x = jax.random.normal(kx, (B, S, input_size), jnp.float32)
    params = init_params(kp, input_size, output_size, z_size, depth)

    fwd = jax.jit(transformer_link_forward)
    out = fwd(x, params)
    jax.block_until_ready(out)

    assert out["loc"].shape == (B, S, z_size)
    assert out["scale"].shape == (B, S, z_size)
    assert bool(jnp.all(jnp.isfinite(out["loc"])))
    assert bool(jnp.all(out["scale"] > 0.0))
    print("KERNEL_OK")
</pallas_src>

<mosaic_0001>
module attributes {stable_mosaic.version = 11 : i64} {
  func.func @_embed_kernel(%arg0: i32, %arg1: memref<1x8x16xf32, #tpu.memory_space<vmem>>, %arg2: memref<16x32xf32, #tpu.memory_space<vmem>>, %arg3: memref<1x32xf32, #tpu.memory_space<vmem>>, %arg4: memref<8x32xf32, #tpu.memory_space<vmem>>, %arg5: memref<1x8x32xf32, #tpu.memory_space<vmem>>) attributes {dimension_semantics = [#tpu.dimension_semantics<parallel>], iteration_bounds = array<i64: 2>, scalar_prefetch = 0 : i64, scratch_operands = 0 : i64, tpu.core_type = #tpu.core_type<tc>, window_params = [{transform_indices = @transform_0, window_bounds = array<i64: 1, 8, 16>}, {pipeline_mode = #tpu.pipeline_mode<synchronous>, transform_indices = @transform_1, window_bounds = array<i64: 16, 32>}, {pipeline_mode = #tpu.pipeline_mode<synchronous>, transform_indices = @transform_2, window_bounds = array<i64: 1, 32>}, {pipeline_mode = #tpu.pipeline_mode<synchronous>, transform_indices = @transform_3, window_bounds = array<i64: 8, 32>}, {transform_indices = @transform_4, window_bounds = array<i64: 1, 8, 32>}]} {
    %c0 = arith.constant 0 : index
    %c0_0 = arith.constant 0 : index
    %c0_1 = arith.constant 0 : index
    %0 = vector.load %arg1[%c0, %c0_0, %c0_1] : memref<1x8x16xf32, #tpu.memory_space<vmem>>, vector<1x8x16xf32>
    %1 = vector.shape_cast %0 : vector<1x8x16xf32> to vector<8x16xf32>
    %c0_2 = arith.constant 0 : index
    %c0_3 = arith.constant 0 : index
    %2 = vector.load %arg2[%c0_2, %c0_3] : memref<16x32xf32, #tpu.memory_space<vmem>>, vector<16x32xf32>
    %cst = arith.constant dense<0.000000e+00> : vector<8x32xf32>
    %3 = tpu.matmul %1, %2, %cst {dimension_numbers = #tpu.dot_dimension_numbers<[1], [0], [0], [1], [0, 0, 1, 1], [], []>} : vector<8x16xf32>, vector<16x32xf32>, vector<8x32xf32> -> vector<8x32xf32>
    %c0_4 = arith.constant 0 : index
    %c0_5 = arith.constant 0 : index
    %4 = vector.load %arg3[%c0_4, %c0_5] : memref<1x32xf32, #tpu.memory_space<vmem>>, vector<1x32xf32>
    %5 = vector.broadcast %4 : vector<1x32xf32> to vector<8x32xf32>
    %6 = arith.addf %3, %5 : vector<8x32xf32>
    %c0_6 = arith.constant 0 : index
    %c0_7 = arith.constant 0 : index
    %7 = vector.load %arg4[%c0_6, %c0_7] : memref<8x32xf32, #tpu.memory_space<vmem>>, vector<8x32xf32>
    %8 = arith.addf %6, %7 : vector<8x32xf32>
    %c0_8 = arith.constant 0 : index
    %c0_9 = arith.constant 0 : index
    %c0_10 = arith.constant 0 : index
    %9 = vector.load %arg5[%c0_8, %c0_9, %c0_10] : memref<1x8x32xf32, #tpu.memory_space<vmem>>, vector<1x8x32xf32>
    %10 = vector.shape_cast %9 : vector<1x8x32xf32> to vector<8x32xf32>
    %11 = vector.shape_cast %8 : vector<8x32xf32> to vector<1x8x32xf32>
    tpu.vector_store %arg5[%c0_8, %c0_9, %c0_10], %11 {strides = array<i32>} : memref<1x8x32xf32, #tpu.memory_space<vmem>>, vector<1x8x32xf32>,
    return
  }
  func.func @transform_0(%arg0: i32) -> (i32, i32, i32) {
    %c0_i32 = arith.constant 0 : i32
    %c0_i32_0 = arith.constant 0 : i32
    %c0_i32_1 = arith.constant 0 : i32
    return %arg0, %c0_i32, %c0_i32_0 : i32, i32, i32
  }
  func.func @transform_1(%arg0: i32) -> (i32, i32) {
    %c0_i32 = arith.constant 0 : i32
    %c0_i32_0 = arith.constant 0 : i32
    %c0_i32_1 = arith.constant 0 : i32
    return %c0_i32, %c0_i32_0 : i32, i32
  }
  func.func @transform_2(%arg0: i32) -> (i32, i32) {
    %c0_i32 = arith.constant 0 : i32
    %c0_i32_0 = arith.constant 0 : i32
    %c0_i32_1 = arith.constant 0 : i32
    return %c0_i32, %c0_i32_0 : i32, i32
  }
  func.func @transform_3(%arg0: i32) -> (i32, i32) {
    %c0_i32 = arith.constant 0 : i32
    %c0_i32_0 = arith.constant 0 : i32
    %c0_i32_1 = arith.constant 0 : i32
    return %c0_i32, %c0_i32_0 : i32, i32
  }
  func.func @transform_4(%arg0: i32) -> (i32, i32, i32) {
    %c0_i32 = arith.constant 0 : i32
    %c0_i32_0 = arith.constant 0 : i32
    %c0_i32_1 = arith.constant 0 : i32
    return %arg0, %c0_i32, %c0_i32_0 : i32, i32, i32
  }
}

module attributes {stable_mosaic.version = 11 : i64} {
  func.func @_heads_kernel(%arg0: i32, %arg1: memref<1x8x32xf32, #tpu.memory_space<vmem>>, %arg2: memref<32x8xf32, #tpu.memory_space<vmem>>, %arg3: memref<1x8xf32, #tpu.memory_space<vmem>>, %arg4: memref<32x8xf32, #tpu.memory_space<vmem>>, %arg5: memref<1x8xf32, #tpu.memory_space<vmem>>, %arg6: memref<1x8x8xf32, #tpu.memory_space<vmem>>, %arg7: memref<1x8x8xf32, #tpu.memory_space<vmem>>) attributes {dimension_semantics = [#tpu.dimension_semantics<parallel>], iteration_bounds = array<i64: 2>, scalar_prefetch = 0 : i64, scratch_operands = 0 : i64, tpu.core_type = #tpu.core_type<tc>, window_params = [{transform_indices = @transform_0, window_bounds = array<i64: 1, 8, 32>}, {pipeline_mode = #tpu.pipeline_mode<synchronous>, transform_indices = @transform_1, window_bounds = array<i64: 32, 8>}, {pipeline_mode = #tpu.pipeline_mode<synchronous>, transform_indices = @transform_2, window_bounds = array<i64: 1, 8>}, {pipeline_mode = #tpu.pipeline_mode<synchronous>, transform_indices = @transform_3, window_bounds = array<i64: 32, 8>}, {pipeline_mode = #tpu.pipeline_mode<synchronous>, transform_indices = @transform_4, window_bounds = array<i64: 1, 8>}, {transform_indices = @transform_5, window_bounds = array<i64: 1, 8, 8>}, {transform_indices = @transform_6, window_bounds = array<i64: 1, 8, 8>}]} {
    %c0 = arith.constant 0 : index
    %c0_0 = arith.constant 0 : index
    %c0_1 = arith.constant 0 : index
    %0 = vector.load %arg1[%c0, %c0_0, %c0_1] : memref<1x8x32xf32, #tpu.memory_space<vmem>>, vector<1x8x32xf32>
    %1 = vector.shape_cast %0 : vector<1x8x32xf32> to vector<8x32xf32>
    %c0_2 = arith.constant 0 : index
    %c0_3 = arith.constant 0 : index
    %2 = vector.load %arg2[%c0_2, %c0_3] : memref<32x8xf32, #tpu.memory_space<vmem>>, vector<32x8xf32>
    %cst = arith.constant dense<0.000000e+00> : vector<8x8xf32>
    %3 = tpu.matmul %1, %2, %cst {dimension_numbers = #tpu.dot_dimension_numbers<[1], [0], [0], [1], [0, 0, 1, 1], [], []>} : vector<8x32xf32>, vector<32x8xf32>, vector<8x8xf32> -> vector<8x8xf32>
    %c0_4 = arith.constant 0 : index
    %c0_5 = arith.constant 0 : index
    %4 = vector.load %arg3[%c0_4, %c0_5] : memref<1x8xf32, #tpu.memory_space<vmem>>, vector<1x8xf32>
    %5 = vector.broadcast %4 : vector<1x8xf32> to vector<8x8xf32>
    %6 = arith.addf %3, %5 : vector<8x8xf32>
    %cst_6 = arith.constant 9.99999993E-9 : f32
    %7 = vector.broadcast %cst_6 : f32 to vector<8x8xf32>
    %8 = arith.addf %6, %7 : vector<8x8xf32>
    %c0_7 = arith.constant 0 : index
    %c0_8 = arith.constant 0 : index
    %c0_9 = arith.constant 0 : index
    %9 = vector.load %arg6[%c0_7, %c0_8, %c0_9] : memref<1x8x8xf32, #tpu.memory_space<vmem>>, vector<1x8x8xf32>
    %10 = vector.shape_cast %9 : vector<1x8x8xf32> to vector<8x8xf32>
    %11 = vector.shape_cast %8 : vector<8x8xf32> to vector<1x8x8xf32>
    tpu.vector_store %arg6[%c0_7, %c0_8, %c0_9], %11 {strides = array<i32>} : memref<1x8x8xf32, #tpu.memory_space<vmem>>, vector<1x8x8xf32>,
    %c0_10 = arith.constant 0 : index
    %c0_11 = arith.constant 0 : index
    %12 = vector.load %arg4[%c0_10, %c0_11] : memref<32x8xf32, #tpu.memory_space<vmem>>, vector<32x8xf32>
    %cst_12 = arith.constant dense<0.000000e+00> : vector<8x8xf32>
    %13 = tpu.matmul %1, %12, %cst_12 {dimension_numbers = #tpu.dot_dimension_numbers<[1], [0], [0], [1], [0, 0, 1, 1], [], []>} : vector<8x32xf32>, vector<32x8xf32>, vector<8x8xf32> -> vector<8x8xf32>
    %c0_13 = arith.constant 0 : index
    %c0_14 = arith.constant 0 : index
    %14 = vector.load %arg5[%c0_13, %c0_14] : memref<1x8xf32, #tpu.memory_space<vmem>>, vector<1x8xf32>
    %15 = vector.broadcast %14 : vector<1x8xf32> to vector<8x8xf32>
    %16 = arith.addf %13, %15 : vector<8x8xf32>
    %cst_15 = arith.constant 0.000000e+00 : f32
    %17 = vector.broadcast %cst_15 : f32 to vector<8x8xf32>
    %18 = arith.maximumf %16, %17 : vector<8x8xf32>
    %19 = math.absf %16 : vector<8x8xf32>
    %cst_16 = arith.constant 0.000000e+00 : f32
    %20 = vector.broadcast %cst_16 : f32 to vector<8x8xf32>
    %21 = arith.subf %20, %19 : vector<8x8xf32>
    %22 = math.exp %21 : vector<8x8xf32>
    %23 = math.log1p %22 : vector<8x8xf32>
    %24 = arith.addf %18, %23 : vector<8x8xf32>
    %cst_17 = arith.constant 9.99999993E-9 : f32
    %25 = vector.broadcast %cst_17 : f32 to vector<8x8xf32>
    %26 = arith.addf %24, %25 : vector<8x8xf32>
    %c0_18 = arith.constant 0 : index
    %c0_19 = arith.constant 0 : index
    %c0_20 = arith.constant 0 : index
    %27 = vector.load %arg7[%c0_18, %c0_19, %c0_20] : memref<1x8x8xf32, #tpu.memory_space<vmem>>, vector<1x8x8xf32>
    %28 = vector.shape_cast %27 : vector<1x8x8xf32> to vector<8x8xf32>
    %29 = vector.shape_cast %26 : vector<8x8xf32> to vector<1x8x8xf32>
    tpu.vector_store %arg7[%c0_18, %c0_19, %c0_20], %29 {strides = array<i32>} : memref<1x8x8xf32, #tpu.memory_space<vmem>>, vector<1x8x8xf32>,
    return
  }
  func.func @transform_0(%arg0: i32) -> (i32, i32, i32) {
    %c0_i32 = arith.constant 0 : i32
    %c0_i32_0 = arith.constant 0 : i32
    %c0_i32_1 = arith.constant 0 : i32
    return %arg0, %c0_i32, %c0_i32_0 : i32, i32, i32
  }
  func.func @transform_1(%arg0: i32) -> (i32, i32) {
    %c0_i32 = arith.constant 0 : i32
    %c0_i32_0 = arith.constant 0 : i32
    %c0_i32_1 = arith.constant 0 : i32
    return %c0_i32, %c0_i32_0 : i32, i32
  }
  func.func @transform_2(%arg0: i32) -> (i32, i32) {
    %c0_i32 = arith.constant 0 : i32
    %c0_i32_0 = arith.constant 0 : i32
    %c0_i32_1 = arith.constant 0 : i32
    return %c0_i32, %c0_i32_0 : i32, i32
  }
  func.func @transform_3(%arg0: i32) -> (i32, i32) {
    %c0_i32 = arith.constant 0 : i32
    %c0_i32_0 = arith.constant 0 : i32
    %c0_i32_1 = arith.constant 0 : i32
    return %c0_i32, %c0_i32_0 : i32, i32
  }
  func.func @transform_4(%arg0: i32) -> (i32, i32) {
    %c0_i32 = arith.constant 0 : i32
    %c0_i32_0 = arith.constant 0 : i32
    %c0_i32_1 = arith.constant 0 : i32
    return %c0_i32, %c0_i32_0 : i32, i32
  }
  func.func @transform_5(%arg0: i32) -> (i32, i32, i32) {
    %c0_i32 = arith.constant 0 : i32
    %c0_i32_0 = arith.constant 0 : i32
    %c0_i32_1 = arith.constant 0 : i32
    return %arg0, %c0_i32, %c0_i32_0 : i32, i32, i32
  }
  func.func @transform_6(%arg0: i32) -> (i32, i32, i32) {
    %c0_i32 = arith.constant 0 : i32
    %c0_i32_0 = arith.constant 0 : i32
    %c0_i32_1 = arith.constant 0 : i32
    return %arg0, %c0_i32, %c0_i32_0 : i32, i32, i32
  }
}

module attributes {stable_mosaic.version = 11 : i64} {
  func.func @_encoder_layer_kernel(%arg0: i32, %arg1: memref<1x8x32xf32, #tpu.memory_space<vmem>>, %arg2: memref<32x96xf32, #tpu.memory_space<vmem>>, %arg3: memref<1x96xf32, #tpu.memory_space<vmem>>, %arg4: memref<32x32xf32, #tpu.memory_space<vmem>>, %arg5: memref<1x32xf32, #tpu.memory_space<vmem>>, %arg6: memref<1x32xf32, #tpu.memory_space<vmem>>, %arg7: memref<1x32xf32, #tpu.memory_space<vmem>>, %arg8: memref<32x32xf32, #tpu.memory_space<vmem>>, %arg9: memref<1x32xf32, #tpu.memory_space<vmem>>, %arg10: memref<32x32xf32, #tpu.memory_space<vmem>>, %arg11: memref<1x32xf32, #tpu.memory_space<vmem>>, %arg12: memref<1x32xf32, #tpu.memory_space<vmem>>, %arg13: memref<1x32xf32, #tpu.memory_space<vmem>>, %arg14: memref<1x8x32xf32, #tpu.memory_space<vmem>>) attributes {dimension_semantics = [#tpu.dimension_semantics<parallel>], iteration_bounds = array<i64: 2>, scalar_prefetch = 0 : i64, scratch_operands = 0 : i64, tpu.core_type = #tpu.core_type<tc>, window_params = [{transform_indices = @transform_0, window_bounds = array<i64: 1, 8, 32>}, {pipeline_mode = #tpu.pipeline_mode<synchronous>, transform_indices = @transform_1, window_bounds = array<i64: 32, 96>}, {pipeline_mode = #tpu.pipeline_mode<synchronous>, transform_indices = @transform_2, window_bounds = array<i64: 1, 96>}, {pipeline_mode = #tpu.pipeline_mode<synchronous>, transform_indices = @transform_3, window_bounds = array<i64: 32, 32>}, {pipeline_mode = #tpu.pipeline_mode<synchronous>, transform_indices = @transform_4, window_bounds = array<i64: 1, 32>}, {pipeline_mode = #tpu.pipeline_mode<synchronous>, transform_indices = @transform_5, window_bounds = array<i64: 1, 32>}, {pipeline_mode = #tpu.pipeline_mode<synchronous>, transform_indices = @transform_6, window_bounds = array<i64: 1, 32>}, {pipeline_mode = #tpu.pipeline_mode<synchronous>, transform_indices = @transform_7, window_bounds = array<i64: 32, 32>}, {pipeline_mode = #tpu.pipeline_mode<synchronous>, transform_indices = @transform_8, window_bounds = array<i64: 1, 32>}, {pipeline_mode = #tpu.pipeline_mode<synchronous>, transform_indices = @transform_9, window_bounds = array<i64: 32, 32>}, {pipeline_mode = #tpu.pipeline_mode<synchronous>, transform_indices = @transform_10, window_bounds = array<i64: 1, 32>}, {pipeline_mode = #tpu.pipeline_mode<synchronous>, transform_indices = @transform_11, window_bounds = array<i64: 1, 32>}, {pipeline_mode = #tpu.pipeline_mode<synchronous>, transform_indices = @transform_12, window_bounds = array<i64: 1, 32>}, {transform_indices = @transform_13, window_bounds = array<i64: 1, 8, 32>}]} {
    %c0 = arith.constant 0 : index
    %c0_0 = arith.constant 0 : index
    %c0_1 = arith.constant 0 : index
    %0 = vector.load %arg1[%c0, %c0_0, %c0_1] : memref<1x8x32xf32, #tpu.memory_space<vmem>>, vector<1x8x32xf32>
    %1 = vector.shape_cast %0 : vector<1x8x32xf32> to vector<8x32xf32>
    %c0_2 = arith.constant 0 : index
    %c0_3 = arith.constant 0 : index
    %2 = vector.load %arg2[%c0_2, %c0_3] : memref<32x96xf32, #tpu.memory_space<vmem>>, vector<32x96xf32>
    %cst = arith.constant dense<0.000000e+00> : vector<8x96xf32>
    %3 = tpu.matmul %1, %2, %cst {dimension_numbers = #tpu.dot_dimension_numbers<[1], [0], [0], [1], [0, 0, 1, 1], [], []>} : vector<8x32xf32>, vector<32x96xf32>, vector<8x96xf32> -> vector<8x96xf32>
    %c0_4 = arith.constant 0 : index
    %c0_5 = arith.constant 0 : index
    %4 = vector.load %arg3[%c0_4, %c0_5] : memref<1x96xf32, #tpu.memory_space<vmem>>, vector<1x96xf32>
    %5 = vector.broadcast %4 : vector<1x96xf32> to vector<8x96xf32>
    %6 = arith.addf %3, %5 : vector<8x96xf32>
    %7 = tpu.iota {dimensions = array<i32: 0>} : vector<8x8xi32>
    %8 = tpu.iota {dimensions = array<i32: 1>} : vector<8x8xi32>
    %9 = arith.cmpi sle, %8, %7 : vector<8x8xi32>
    %c0_6 = arith.constant 0 : index
    %c0_7 = arith.constant 0 : index
    %10 = vector.load %arg4[%c0_6, %c0_7] : memref<32x32xf32, #tpu.memory_space<vmem>>, vector<32x32xf32>
    %c0_8 = arith.constant 0 : index
    %c0_9 = arith.constant 0 : index
    %11 = vector.load %arg5[%c0_8, %c0_9] : memref<1x32xf32, #tpu.memory_space<vmem>>, vector<1x32xf32>
    %12 = vector.extract_strided_slice %6 {offsets = [0, 0], sizes = [8, 16], strides = [1, 1]} : vector<8x96xf32> to vector<8x16xf32>
    %13 = vector.extract_strided_slice %6 {offsets = [0, 32], sizes = [8, 16], strides = [1, 1]} : vector<8x96xf32> to vector<8x16xf32>
    %14 = vector.extract_strided_slice %6 {offsets = [0, 64], sizes = [8, 16], strides = [1, 1]} : vector<8x96xf32> to vector<8x16xf32>
    %cst_10 = arith.constant dense<0.000000e+00> : vector<8x8xf32>
    %15 = tpu.matmul %12, %13, %cst_10 {dimension_numbers = #tpu.dot_dimension_numbers<[1], [1], [0], [0], [0, 0, 1, 0], [], []>} : vector<8x16xf32>, vector<8x16xf32>, vector<8x8xf32> -> vector<8x8xf32>
    %cst_11 = arith.constant 2.500000e-01 : f32
    %16 = vector.broadcast %cst_11 : f32 to vector<8x8xf32>
    %17 = arith.mulf %15, %16 : vector<8x8xf32>
    %cst_12 = arith.constant -1.000000e+30 : f32
    %18 = vector.broadcast %cst_12 : f32 to vector<8x8xf32>
    %19 = arith.select %9, %17, %18 : vector<8x8xi1>, vector<8x8xf32>
    %cst_13 = arith.constant dense<0xFF800000> : vector<8xf32>
    %20 = vector.multi_reduction <maximumf>, %19, %cst_13 [1] : vector<8x8xf32> to vector<8xf32>
    %21 = vector.shape_cast %20 : vector<8xf32> to vector<8x1xf32>
    %22 = vector.broadcast %21 : vector<8x1xf32> to vector<8x8xf32>
    %23 = arith.subf %19, %22 : vector<8x8xf32>
    %24 = math.exp %23 : vector<8x8xf32>
    %cst_14 = arith.constant dense<0.000000e+00> : vector<8xf32>
    %25 = vector.multi_reduction <add>, %24, %cst_14 [1] : vector<8x8xf32> to vector<8xf32>
    %26 = vector.shape_cast %25 : vector<8xf32> to vector<8x1xf32>
    %27 = tpu.reciprocal %26 {approx = true} : vector<8x1xf32> -> vector<8x1xf32>
    %28 = vector.broadcast %27 : vector<8x1xf32> to vector<8x8xf32>
    %29 = arith.mulf %24, %28 : vector<8x8xf32>
    %cst_15 = arith.constant dense<0.000000e+00> : vector<8x16xf32>
    %30 = tpu.matmul %29, %14, %cst_15 {dimension_numbers = #tpu.dot_dimension_numbers<[1], [0], [0], [1], [0, 0, 1, 1], [], []>} : vector<8x8xf32>, vector<8x16xf32>, vector<8x16xf32> -> vector<8x16xf32>
    %31 = vector.extract_strided_slice %10 {offsets = [0, 0], sizes = [16, 32], strides = [1, 1]} : vector<32x32xf32> to vector<16x32xf32>
    %cst_16 = arith.constant dense<0.000000e+00> : vector<8x32xf32>
    %32 = tpu.matmul %30, %31, %cst_16 {dimension_numbers = #tpu.dot_dimension_numbers<[1], [0], [0], [1], [0, 0, 1, 1], [], []>} : vector<8x16xf32>, vector<16x32xf32>, vector<8x32xf32> -> vector<8x32xf32>
    %33 = vector.broadcast %11 : vector<1x32xf32> to vector<8x32xf32>
    %34 = arith.addf %33, %32 : vector<8x32xf32>
    %35 = vector.extract_strided_slice %6 {offsets = [0, 16], sizes = [8, 16], strides = [1, 1]} : vector<8x96xf32> to vector<8x16xf32>
    %36 = vector.extract_strided_slice %6 {offsets = [0, 48], sizes = [8, 16], strides = [1, 1]} : vector<8x96xf32> to vector<8x16xf32>
    %37 = vector.extract_strided_slice %6 {offsets = [0, 80], sizes = [8, 16], strides = [1, 1]} : vector<8x96xf32> to vector<8x16xf32>
    %cst_17 = arith.constant dense<0.000000e+00> : vector<8x8xf32>
    %38 = tpu.matmul %35, %36, %cst_17 {dimension_numbers = #tpu.dot_dimension_numbers<[1], [1], [0], [0], [0, 0, 1, 0], [], []>} : vector<8x16xf32>, vector<8x16xf32>, vector<8x8xf32> -> vector<8x8xf32>
    %cst_18 = arith.constant 2.500000e-01 : f32
    %39 = vector.broadcast %cst_18 : f32 to vector<8x8xf32>
    %40 = arith.mulf %38, %39 : vector<8x8xf32>
    %cst_19 = arith.constant -1.000000e+30 : f32
    %41 = vector.broadcast %cst_19 : f32 to vector<8x8xf32>
    %42 = arith.select %9, %40, %41 : vector<8x8xi1>, vector<8x8xf32>
    %cst_20 = arith.constant dense<0xFF800000> : vector<8xf32>
    %43 = vector.multi_reduction <maximumf>, %42, %cst_20 [1] : vector<8x8xf32> to vector<8xf32>
    %44 = vector.shape_cast %43 : vector<8xf32> to vector<8x1xf32>
    %45 = vector.broadcast %44 : vector<8x1xf32> to vector<8x8xf32>
    %46 = arith.subf %42, %45 : vector<8x8xf32>
    %47 = math.exp %46 : vector<8x8xf32>
    %cst_21 = arith.constant dense<0.000000e+00> : vector<8xf32>
    %48 = vector.multi_reduction <add>, %47, %cst_21 [1] : vector<8x8xf32> to vector<8xf32>
    %49 = vector.shape_cast %48 : vector<8xf32> to vector<8x1xf32>
    %50 = tpu.reciprocal %49 {approx = true} : vector<8x1xf32> -> vector<8x1xf32>
    %51 = vector.broadcast %50 : vector<8x1xf32> to vector<8x8xf32>
    %52 = arith.mulf %47, %51 : vector<8x8xf32>
    %cst_22 = arith.constant dense<0.000000e+00> : vector<8x16xf32>
    %53 = tpu.matmul %52, %37, %cst_22 {dimension_numbers = #tpu.dot_dimension_numbers<[1], [0], [0], [1], [0, 0, 1, 1], [], []>} : vector<8x8xf32>, vector<8x16xf32>, vector<8x16xf32> -> vector<8x16xf32>
    %54 = vector.extract_strided_slice %10 {offsets = [16, 0], sizes = [16, 32], strides = [1, 1]} : vector<32x32xf32> to vector<16x32xf32>
    %cst_23 = arith.constant dense<0.000000e+00> : vector<8x32xf32>
    %55 = tpu.matmul %53, %54, %cst_23 {dimension_numbers = #tpu.dot_dimension_numbers<[1], [0], [0], [1], [0, 0, 1, 1], [], []>} : vector<8x16xf32>, vector<16x32xf32>, vector<8x32xf32> -> vector<8x32xf32>
    %56 = arith.addf %34, %55 : vector<8x32xf32>
    %57 = arith.addf %1, %56 : vector<8x32xf32>
    %c0_24 = arith.constant 0 : index
    %c0_25 = arith.constant 0 : index
    %58 = vector.load %arg6[%c0_24, %c0_25] : memref<1x32xf32, #tpu.memory_space<vmem>>, vector<1x32xf32>
    %c0_26 = arith.constant 0 : index
    %c0_27 = arith.constant 0 : index
    %59 = vector.load %arg7[%c0_26, %c0_27] : memref<1x32xf32, #tpu.memory_space<vmem>>, vector<1x32xf32>
    %cst_28 = arith.constant dense<0.000000e+00> : vector<8xf32>
    %60 = vector.multi_reduction <add>, %57, %cst_28 [1] : vector<8x32xf32> to vector<8xf32>
    %61 = vector.shape_cast %60 : vector<8xf32> to vector<8x1xf32>
    %cst_29 = arith.constant 3.200000e+01 : f32
    %62 = vector.broadcast %cst_29 : f32 to vector<8x1xf32>
    %63 = arith.divf %61, %62 : vector<8x1xf32>
    %64 = vector.broadcast %63 : vector<8x1xf32> to vector<8x32xf32>
    %65 = arith.subf %57, %64 : vector<8x32xf32>
    %66 = arith.mulf %65, %65 : vector<8x32xf32>
    %cst_30 = arith.constant dense<0.000000e+00> : vector<8xf32>
    %67 = vector.multi_reduction <add>, %66, %cst_30 [1] : vector<8x32xf32> to vector<8xf32>
    %68 = vector.shape_cast %67 : vector<8xf32> to vector<8x1xf32>
    %cst_31 = arith.constant 3.200000e+01 : f32
    %69 = vector.broadcast %cst_31 : f32 to vector<8x1xf32>
    %70 = arith.divf %68, %69 : vector<8x1xf32>
    %cst_32 = arith.constant 9.99999974E-6 : f32
    %71 = vector.broadcast %cst_32 : f32 to vector<8x1xf32>
    %72 = arith.addf %70, %71 : vector<8x1xf32>
    %73 = math.rsqrt %72 : vector<8x1xf32>
    %74 = vector.broadcast %73 : vector<8x1xf32> to vector<8x32xf32>
    %75 = arith.mulf %65, %74 : vector<8x32xf32>
    %76 = vector.broadcast %58 : vector<1x32xf32> to vector<8x32xf32>
    %77 = arith.mulf %75, %76 : vector<8x32xf32>
    %78 = vector.broadcast %59 : vector<1x32xf32> to vector<8x32xf32>
    %79 = arith.addf %77, %78 : vector<8x32xf32>
    %c0_33 = arith.constant 0 : index
    %c0_34 = arith.constant 0 : index
    %80 = vector.load %arg8[%c0_33, %c0_34] : memref<32x32xf32, #tpu.memory_space<vmem>>, vector<32x32xf32>
    %cst_35 = arith.constant dense<0.000000e+00> : vector<8x32xf32>
    %81 = tpu.matmul %79, %80, %cst_35 {dimension_numbers = #tpu.dot_dimension_numbers<[1], [0], [0], [1], [0, 0, 1, 1], [], []>} : vector<8x32xf32>, vector<32x32xf32>, vector<8x32xf32> -> vector<8x32xf32>
    %c0_36 = arith.constant 0 : index
    %c0_37 = arith.constant 0 : index
    %82 = vector.load %arg9[%c0_36, %c0_37] : memref<1x32xf32, #tpu.memory_space<vmem>>, vector<1x32xf32>
    %83 = vector.broadcast %82 : vector<1x32xf32> to vector<8x32xf32>
    %84 = arith.addf %81, %83 : vector<8x32xf32>
    %cst_38 = arith.constant 5.000000e-01 : f32
    %85 = vector.broadcast %cst_38 : f32 to vector<8x32xf32>
    %86 = arith.mulf %85, %84 : vector<8x32xf32>
    %cst_39 = arith.constant 0.707106769 : f32
    %87 = vector.broadcast %cst_39 : f32 to vector<8x32xf32>
    %88 = arith.mulf %84, %87 : vector<8x32xf32>
    %89 = math.erf %88 : vector<8x32xf32>
    %cst_40 = arith.constant 1.000000e+00 : f32
    %90 = vector.broadcast %cst_40 : f32 to vector<8x32xf32>
    %91 = arith.addf %90, %89 : vector<8x32xf32>
    %92 = arith.mulf %86, %91 : vector<8x32xf32>
    %c0_41 = arith.constant 0 : index
    %c0_42 = arith.constant 0 : index
    %93 = vector.load %arg10[%c0_41, %c0_42] : memref<32x32xf32, #tpu.memory_space<vmem>>, vector<32x32xf32>
    %cst_43 = arith.constant dense<0.000000e+00> : vector<8x32xf32>
    %94 = tpu.matmul %92, %93, %cst_43 {dimension_numbers = #tpu.dot_dimension_numbers<[1], [0], [0], [1], [0, 0, 1, 1], [], []>} : vector<8x32xf32>, vector<32x32xf32>, vector<8x32xf32> -> vector<8x32xf32>
    %c0_44 = arith.constant 0 : index
    %c0_45 = arith.constant 0 : index
    %95 = vector.load %arg11[%c0_44, %c0_45] : memref<1x32xf32, #tpu.memory_space<vmem>>, vector<1x32xf32>
    %96 = vector.broadcast %95 : vector<1x32xf32> to vector<8x32xf32>
    %97 = arith.addf %94, %96 : vector<8x32xf32>
    %98 = arith.addf %79, %97 : vector<8x32xf32>
    %c0_46 = arith.constant 0 : index
    %c0_47 = arith.constant 0 : index
    %99 = vector.load %arg12[%c0_46, %c0_47] : memref<1x32xf32, #tpu.memory_space<vmem>>, vector<1x32xf32>
    %c0_48 = arith.constant 0 : index
    %c0_49 = arith.constant 0 : index
    %100 = vector.load %arg13[%c0_48, %c0_49] : memref<1x32xf32, #tpu.memory_space<vmem>>, vector<1x32xf32>
    %cst_50 = arith.constant dense<0.000000e+00> : vector<8xf32>
    %101 = vector.multi_reduction <add>, %98, %cst_50 [1] : vector<8x32xf32> to vector<8xf32>
    %102 = vector.shape_cast %101 : vector<8xf32> to vector<8x1xf32>
    %cst_51 = arith.constant 3.200000e+01 : f32
    %103 = vector.broadcast %cst_51 : f32 to vector<8x1xf32>
    %104 = arith.divf %102, %103 : vector<8x1xf32>
    %105 = vector.broadcast %104 : vector<8x1xf32> to vector<8x32xf32>
    %106 = arith.subf %98, %105 : vector<8x32xf32>
    %107 = arith.mulf %106, %106 : vector<8x32xf32>
    %cst_52 = arith.constant dense<0.000000e+00> : vector<8xf32>
    %108 = vector.multi_reduction <add>, %107, %cst_52 [1] : vector<8x32xf32> to vector<8xf32>
    %109 = vector.shape_cast %108 : vector<8xf32> to vector<8x1xf32>
    %cst_53 = arith.constant 3.200000e+01 : f32
    %110 = vector.broadcast %cst_53 : f32 to vector<8x1xf32>
    %111 = arith.divf %109, %110 : vector<8x1xf32>
    %cst_54 = arith.constant 9.99999974E-6 : f32
    %112 = vector.broadcast %cst_54 : f32 to vector<8x1xf32>
    %113 = arith.addf %111, %112 : vector<8x1xf32>
    %114 = math.rsqrt %113 : vector<8x1xf32>
    %115 = vector.broadcast %114 : vector<8x1xf32> to vector<8x32xf32>
    %116 = arith.mulf %106, %115 : vector<8x32xf32>
    %117 = vector.broadcast %99 : vector<1x32xf32> to vector<8x32xf32>
    %118 = arith.mulf %116, %117 : vector<8x32xf32>
    %119 = vector.broadcast %100 : vector<1x32xf32> to vector<8x32xf32>
    %120 = arith.addf %118, %119 : vector<8x32xf32>
    %c0_55 = arith.constant 0 : index
    %c0_56 = arith.constant 0 : index
    %c0_57 = arith.constant 0 : index
    %121 = vector.load %arg14[%c0_55, %c0_56, %c0_57] : memref<1x8x32xf32, #tpu.memory_space<vmem>>, vector<1x8x32xf32>
    %122 = vector.shape_cast %121 : vector<1x8x32xf32> to vector<8x32xf32>
    %123 = vector.shape_cast %120 : vector<8x32xf32> to vector<1x8x32xf32>
    tpu.vector_store %arg14[%c0_55, %c0_56, %c0_57], %123 {strides = array<i32>} : memref<1x8x32xf32, #tpu.memory_space<vmem>>, vector<1x8x32xf32>,
    return
  }
  func.func @transform_0(%arg0: i32) -> (i32, i32, i32) {
    %c0_i32 = arith.constant 0 : i32
    %c0_i32_0 = arith.constant 0 : i32
    %c0_i32_1 = arith.constant 0 : i32
    return %arg0, %c0_i32, %c0_i32_0 : i32, i32, i32
  }
  func.func @transform_1(%arg0: i32) -> (i32, i32) {
    %c0_i32 = arith.constant 0 : i32
    %c0_i32_0 = arith.constant 0 : i32
    %c0_i32_1 = arith.constant 0 : i32
    return %c0_i32, %c0_i32_0 : i32, i32
  }
  func.func @transform_2(%arg0: i32) -> (i32, i32) {
    %c0_i32 = arith.constant 0 : i32
    %c0_i32_0 = arith.constant 0 : i32
    %c0_i32_1 = arith.constant 0 : i32
    return %c0_i32, %c0_i32_0 : i32, i32
  }
  func.func @transform_3(%arg0: i32) -> (i32, i32) {
    %c0_i32 = arith.constant 0 : i32
    %c0_i32_0 = arith.constant 0 : i32
    %c0_i32_1 = arith.constant 0 : i32
    return %c0_i32, %c0_i32_0 : i32, i32
  }
  func.func @transform_4(%arg0: i32) -> (i32, i32) {
    %c0_i32 = arith.constant 0 : i32
    %c0_i32_0 = arith.constant 0 : i32
    %c0_i32_1 = arith.constant 0 : i32
    return %c0_i32, %c0_i32_0 : i32, i32
  }
  func.func @transform_5(%arg0: i32) -> (i32, i32) {
    %c0_i32 = arith.constant 0 : i32
    %c0_i32_0 = arith.constant 0 : i32
    %c0_i32_1 = arith.constant 0 : i32
    return %c0_i32, %c0_i32_0 : i32, i32
  }
  func.func @transform_6(%arg0: i32) -> (i32, i32) {
    %c0_i32 = arith.constant 0 : i32
    %c0_i32_0 = arith.constant 0 : i32
    %c0_i32_1 = arith.constant 0 : i32
    return %c0_i32, %c0_i32_0 : i32, i32
  }
  func.func @transform_7(%arg0: i32) -> (i32, i32) {
    %c0_i32 = arith.constant 0 : i32
    %c0_i32_0 = arith.constant 0 : i32
    %c0_i32_1 = arith.constant 0 : i32
    return %c0_i32, %c0_i32_0 : i32, i32
  }
  func.func @transform_8(%arg0: i32) -> (i32, i32) {
    %c0_i32 = arith.constant 0 : i32
    %c0_i32_0 = arith.constant 0 : i32
    %c0_i32_1 = arith.constant 0 : i32
    return %c0_i32, %c0_i32_0 : i32, i32
  }
  func.func @transform_9(%arg0: i32) -> (i32, i32) {
    %c0_i32 = arith.constant 0 : i32
    %c0_i32_0 = arith.constant 0 : i32
    %c0_i32_1 = arith.constant 0 : i32
    return %c0_i32, %c0_i32_0 : i32, i32
  }
  func.func @transform_10(%arg0: i32) -> (i32, i32) {
    %c0_i32 = arith.constant 0 : i32
    %c0_i32_0 = arith.constant 0 : i32
    %c0_i32_1 = arith.constant 0 : i32
    return %c0_i32, %c0_i32_0 : i32, i32
  }
  func.func @transform_11(%arg0: i32) -> (i32, i32) {
    %c0_i32 = arith.constant 0 : i32
    %c0_i32_0 = arith.constant 0 : i32
    %c0_i32_1 = arith.constant 0 : i32
    return %c0_i32, %c0_i32_0 : i32, i32
  }
  func.func @transform_12(%arg0: i32) -> (i32, i32) {
    %c0_i32 = arith.constant 0 : i32
    %c0_i32_0 = arith.constant 0 : i32
    %c0_i32_1 = arith.constant 0 : i32
    return %c0_i32, %c0_i32_0 : i32, i32
  }
  func.func @transform_13(%arg0: i32) -> (i32, i32, i32) {
    %c0_i32 = arith.constant 0 : i32
    %c0_i32_0 = arith.constant 0 : i32
    %c0_i32_1 = arith.constant 0 : i32
    return %arg0, %c0_i32, %c0_i32_0 : i32, i32, i32
  }
}

</mosaic_0001>

<llo_original>
// kernel: transformer_link_forward.4
$region0: #{transformer_link_forward.4}
  #allocation0 [shape = 'u32[]', space=smem, size = 0x4, offset = 0x4, fixed_abs, tag = 'smem constant byte address 0x4 - core index']
  #allocation1 [shape = 'u32[144,128]{1,0:T(1,128)}', space=vmem, size = 0x12000, scoped, tag = 'internal scratch']
  %s0 = inlined_call_operand.vmem [shape: f32[2,8,16], index: 0, kind: input, shape index: {}]
  %s1 = inlined_call_operand.vmem [shape: f32[16,32], index: 1, kind: input, shape index: {}]
  %s2 = inlined_call_operand.vmem [shape: f32[1,32], index: 2, kind: input, shape index: {}]
  %s3 = inlined_call_operand.vmem [shape: f32[8,32], index: 3, kind: input, shape index: {}]
  %s4 = inlined_call_operand.vmem [shape: f32[2,8,32], index: 4, kind: output, shape index: {}]
  %s5 = sld [smem:[#allocation0]]
  $region49: #{transformer_link_forward.4} parent=0
    _
  %s7 = ssub.s32 1, %s5
  %s8 = scalar_select 0, %s7, %s5
  loop: start=0, step=1, limit=4
  $region2: #{transformer_link_forward.4} parent=0 // loop_pre_header
    _
  $region3: #{transformer_link_forward.4} parent=0 // loop_header
    %s10 = sphi 0, %s14
    %p11 = scmp.ge.s32.totalorder %s10, 4
    %s20 = sphi 0, %s22
    %s23 = sphi 0, %s20
    %s24 = sphi 0, %s23
    %s40 = sphi 0, %s24
    %s44 = sphi 0, %s44
    %s46 = sphi 0, %s44
    %s47 = sphi 0, %s46
    %s61 = sphi 0, %s47
    %s65 = sphi 0, %s65
    %s67 = sphi 0, %s65
    %s68 = sphi 0, %s67
    %s82 = sphi 0, %s68
    %s86 = sphi 0, %s86
    %s88 = sphi 0, %s86
    %s89 = sphi 0, %s88
    %s103 = sphi 0, %s89
    %s109 = sphi 0, %s111
    %s112 = sphi 0, %s109
    %s113 = sphi 0, %s112
    %s129 = sphi 0, %s113
  $region4: #{transformer_link_forward.4} parent=0 // loop_header_branch
    %13 = sbr.rel (%p11) target = $region8
  $region5: #{transformer_link_forward.4} parent=0 // loop_body
    %s15 = ssub.s32 %s10, 1
    %s16 = ssub.s32 %s10, 2
    %s17 = sadd.s32 %s10, 1
    %s18 = ssub.s32 %s10, %s17
    %p19 = scmp.eq.s32.totalorder %s18, 0
    %s21 = sadd.s32 %s20, 1
    %s22 = scalar_select %p19, %s20, %s21
    %p25 = pneg %p19
    %p26 = scmp.eq.s32.totalorder %s10, 1
    %p27 = por %p25, %p26
    %p28 = scmp.ne.s32.totalorder %s20, %s23
    %p29 = scmp.eq.s32.totalorder %s10, 0
    %p30 = por %p28, %p29
    %p31 = scmp.ne.s32.totalorder %s20, %s23
    %p32 = scmp.eq.s32.totalorder %s15, 1
    %p33 = por %p31, %p32
    %p34 = scmp.ne.s32.totalorder %s23, %s24
    %p35 = scmp.eq.s32.totalorder %s15, 0
    %p36 = por %p34, %p35
    %p37 = scmp.ne.s32.totalorder %s23, %s24
    %p38 = scmp.eq.s32.totalorder %s16, 1
    %p39 = por %p37, %p38
    %p41 = scmp.ne.s32.totalorder %s24, %s40
    %p42 = scmp.eq.s32.totalorder %s16, 0
    %p43 = por %p41, %p42
    %s45 = sadd.s32 %s44, 1
    %p48 = scmp.eq.s32.totalorder %s10, 1
    %p49 = scmp.ne.s32.totalorder %s44, %s46
    %p50 = scmp.eq.s32.totalorder %s10, 0
    %p51 = por %p49, %p50
    %p52 = scmp.ne.s32.totalorder %s44, %s46
    %p53 = scmp.eq.s32.totalorder %s15, 1
    %p54 = por %p52, %p53
    %p55 = scmp.ne.s32.totalorder %s46, %s47
    %p56 = scmp.eq.s32.totalorder %s15, 0
    %p57 = por %p55, %p56
    %p58 = scmp.ne.s32.totalorder %s46, %s47
    %p59 = scmp.eq.s32.totalorder %s16, 1
    %p60 = por %p58, %p59
    %p62 = scmp.ne.s32.totalorder %s47, %s61
    %p63 = scmp.eq.s32.totalorder %s16, 0
    %p64 = por %p62, %p63
    %s66 = sadd.s32 %s65, 1
    %p69 = scmp.eq.s32.totalorder %s10, 1
    %p70 = scmp.ne.s32.totalorder %s65, %s67
    %p71 = scmp.eq.s32.totalorder %s10, 0
    %p72 = por %p70, %p71
    %p73 = scmp.ne.s32.totalorder %s65, %s67
    %p74 = scmp.eq.s32.totalorder %s15, 1
    %p75 = por %p73, %p74
    %p76 = scmp.ne.s32.totalorder %s67, %s68
    %p77 = scmp.eq.s32.totalorder %s15, 0
    %p78 = por %p76, %p77
    %p79 = scmp.ne.s32.totalorder %s67, %s68
    %p80 = scmp.eq.s32.totalorder %s16, 1
    %p81 = por %p79, %p80
    %p83 = scmp.ne.s32.totalorder %s68, %s82
    %p84 = scmp.eq.s32.totalorder %s16, 0
    %p85 = por %p83, %p84
    %s87 = sadd.s32 %s86, 1
    %p90 = scmp.eq.s32.totalorder %s10, 1
    %p91 = scmp.ne.s32.totalorder %s86, %s88
    %p92 = scmp.eq.s32.totalorder %s10, 0
    %p93 = por %p91, %p92
    %p94 = scmp.ne.s32.totalorder %s86, %s88
    %p95 = scmp.eq.s32.totalorder %s15, 1
    %p96 = por %p94, %p95
    %p97 = scmp.ne.s32.totalorder %s88, %s89
    %p98 = scmp.eq.s32.totalorder %s15, 0
    %p99 = por %p97, %p98
    %p100 = scmp.ne.s32.totalorder %s88, %s89
    %p101 = scmp.eq.s32.totalorder %s16, 1
    %p102 = por %p100, %p101
    %p104 = scmp.ne.s32.totalorder %s89, %s103
    %p105 = scmp.eq.s32.totalorder %s16, 0
    %p106 = por %p104, %p105
    %s107 = ssub.s32 %s10, %s17
    %p108 = scmp.eq.s32.totalorder %s107, 0
    %s110 = sadd.s32 %s109, 1
    %s111 = scalar_select %p108, %s109, %s110
    %p114 = pneg %p108
    %p115 = scmp.eq.s32.totalorder %s10, 1
    %p116 = por %p114, %p115
    %p117 = scmp.ne.s32.totalorder %s109, %s112
    %p118 = scmp.eq.s32.totalorder %s10, 0
    %p119 = por %p117, %p118
    %p120 = scmp.ne.s32.totalorder %s109, %s112
    %p121 = scmp.eq.s32.totalorder %s15, 1
    %p122 = por %p120, %p121
    %p123 = scmp.ne.s32.totalorder %s112, %s113
    %p124 = scmp.eq.s32.totalorder %s15, 0
    %p125 = por %p123, %p124
    %p126 = scmp.ne.s32.totalorder %s112, %s113
    %p127 = scmp.eq.s32.totalorder %s16, 1
    %p128 = por %p126, %p127
    %p130 = scmp.ne.s32.totalorder %s113, %s129
    %p131 = scmp.eq.s32.totalorder %s16, 0
    %p132 = por %p130, %p131
    %p133 = scmp.le.s32.totalorder 1, %s10
    %p134 = scmp.lt.s32.totalorder %s10, 3
    %p135 = pnand %p133, %p134
    %p136 = pneg %p135
    // Predicated region
    $region9: #{transformer_link_forward.4} parent=5 // pred_check
      _
    $region10: #{transformer_link_forward.4} parent=5 // pred_check_branch
      %138 = sbr.rel (%p135) target = $region12
    $region11: #{transformer_link_forward.4} parent=5 // pred_region
      %s139 = ssub.s32 %s10, 1
      // Predicated region
      $region13: #{transformer_link_forward.4} parent=11 // pred_check
        %p140 = pneg %p57
      $region14: #{transformer_link_forward.4} parent=11 // pred_check_branch
        %142 = sbr.rel (%p140) target = $region16
      $region15: #{transformer_link_forward.4} parent=11 // pred_region
        _
      $region16: #{transformer_link_forward.4} parent=11 // pred_fallthru
        _
      // Predicated region
      $region17: #{transformer_link_forward.4} parent=11 // pred_check
        %p143 = pneg %p78
      $region18: #{transformer_link_forward.4} parent=11 // pred_check_branch
        %145 = sbr.rel (%p143) target = $region20
      $region19: #{transformer_link_forward.4} parent=11 // pred_region
        _
      $region20: #{transformer_link_forward.4} parent=11 // pred_fallthru
        _
      // Predicated region
      $region21: #{transformer_link_forward.4} parent=11 // pred_check
        %p146 = pneg %p99
      $region22: #{transformer_link_forward.4} parent=11 // pred_check_branch
        %148 = sbr.rel (%p146) target = $region24
      $region23: #{transformer_link_forward.4} parent=11 // pred_region
        _
      $region24: #{transformer_link_forward.4} parent=11 // pred_fallthru
        _
    $region12: #{transformer_link_forward.4} parent=5 // pred_fallthru
      _
    %p149 = scmp.lt.s32.totalorder %s10, 2
    // Predicated region
    $region25: #{transformer_link_forward.4} parent=5 // pred_check
      %p150 = pneg %p149
    $region26: #{transformer_link_forward.4} parent=5 // pred_check_branch
      %152 = sbr.rel (%p150) target = $region28
    $region27: #{transformer_link_forward.4} parent=5 // pred_region
      // Predicated region
      $region29: #{transformer_link_forward.4} parent=27 // pred_check
        %p153 = pneg %p30
      $region30: #{transformer_link_forward.4} parent=27 // pred_check_branch
        %155 = sbr.rel (%p153) target = $region32
      $region31: #{transformer_link_forward.4} parent=27 // pred_region
        %p156 = scmp.lt.s32.totalorder %s10, 1
        %s157 = scalar_select %p156, %s10, 1
        %s158 = smul.addr %s157, 8
        %s159 = scalar_lea.vmem %s0, %s158
      $region32: #{transformer_link_forward.4} parent=27 // pred_fallthru
        _
    $region28: #{transformer_link_forward.4} parent=5 // pred_fallthru
      _
    %p160 = scmp.le.s32.totalorder 1, %s10
    %p161 = scmp.lt.s32.totalorder %s10, 3
    %p162 = pnand %p160, %p161
    %p163 = pneg %p162
    // Predicated region
    $region33: #{transformer_link_forward.4} parent=5 // pred_check
      _
    $region34: #{transformer_link_forward.4} parent=5 // pred_check_branch
      %165 = sbr.rel (%p162) target = $region36
    $region35: #{transformer_link_forward.4} parent=5 // pred_region
      %s166 = ssub.s32 %s10, 1
      %p167 = scmp.lt.s32.totalorder %s15, 1
      %s168 = scalar_select %p167, %s15, 1
      %s169 = smul.addr %s168, 8
      %s170 = scalar_lea.vmem %s0, %s169
      %p171 = pneg %p36
      %p172 = pneg %p33
      %p173 = pneg %p57
      %p174 = pneg %p54
      %p175 = pneg %p78
      %p176 = pneg %p75
      %p177 = pneg %p99
      %p178 = pneg %p96
      %p179 = pneg %p125
      %p180 = pneg %p122
      %p181 = scmp.lt.s32.totalorder %s15, 1
      %s182 = scalar_select %p181, %s15, 1
      %s183 = smul.addr %s182, 8
      %s184 = scalar_lea.vmem %s4, %s183
      %p185 = scmp.lt.s32.totalorder %s15, 1
      %s186 = scalar_select %p185, %s15, 1
      %s187 = smul.addr %s186, 8
      %s188 = scalar_lea.vmem %s0, %s187
      %p189 = scmp.lt.s32.totalorder %s15, 1
      %s190 = scalar_select %p189, %s15, 1
      %s191 = smul.addr %s190, 8
      %s192 = scalar_lea.vmem %s4, %s191
      %v193 = vld [vmem:[%s188] sm:$0xff]
      %v194 = vld [vmem:[%s1] sm:$0xff]
      %v195 = vld [vmem:[%s1 + $0x8] sm:$0xff]
      %v196 = vld [vmem:[%s2] sm:$0x1]
      %v198 = vlaneseq
      %v199 = vshrl.u32 %v198, 7
      %v200 = vsub.s32 0, %v199
      %v201 = vrot.slane %v196, %v200
      %vm203 = vcmask 130048
      %v205 = vsel %vm203, %v193, 0
      %207 = vmatprep.subr.mxu0 0.0
      %208 = vmatpush1.msra.mxu0 %v194
      %209 = vmatprep.subr.mxu0 0.0
      %210 = vmatpush1.msra.mxu0 %v195
      %211 = vmatprep.subr.mxu0 0.0
      %212 = vmatpush1.msra.mxu0 0.0
      %213 = vmatprep.subr.mxu0 0.0
      %214 = vmatpush1.msra.mxu0 0.0
      %215 = vmatprep.subr.mxu0 0.0
      %216 = vmatpush1.msra.mxu0 0.0
      %217 = vmatprep.subr.mxu0 0.0
      %218 = vmatpush1.msra.mxu0 0.0
      %219 = vmatprep.subr.mxu0 0.0
      %220 = vmatpush1.msra.mxu0 0.0
      %221 = vmatprep.subr.mxu0 0.0
      %222 = vmatpush1.msra.mxu0 0.0
      %223 = vmatprep.subr.mxu0 0.0
      %224 = vmatpush1.msra.mxu0 0.0
      %225 = vmatprep.subr.mxu0 0.0
      %226 = vmatpush1.msra.mxu0 0.0
      %227 = vmatprep.subr.mxu0 0.0
      %228 = vmatpush1.msra.mxu0 0.0
      %229 = vmatprep.subr.mxu0 0.0
      %230 = vmatpush1.msra.mxu0 0.0
      %231 = vmatprep.subr.mxu0 0.0
      %232 = vmatpush1.msra.mxu0 0.0
      %233 = vmatprep.subr.mxu0 0.0
      %234 = vmatpush1.msra.mxu0 0.0
      %235 = vmatprep.subr.mxu0 0.0
      %236 = vmatpush1.msra.mxu0 0.0
      %237 = vmatprep.subr.mxu0 0.0
      %238 = vmatpush1.msra.mxu0 0.0
      %239 = vmatprep.subr.mxu0 0.0
      %240 = vmatpush1.msra.mxu0 0.0
      %241 = vmatprep.subr.mxu0 0.0
      %242 = vmatpush1.msra.mxu0 0.0
      %243 = vmatprep.subr.mxu0 0.0
      %244 = vmatpush1.msra.mxu0 0.0
      %245 = vmatprep.subr.mxu0 0.0
      %246 = vmatpush1.msra.mxu0 0.0
      %247 = vmatprep.subr.mxu0 0.0
      %248 = vmatpush1.msra.mxu0 0.0
      %249 = vmatprep.subr.mxu0 0.0
      %250 = vmatpush1.msra.mxu0 0.0
      %251 = vmatprep.subr.mxu0 0.0
      %252 = vmatpush1.msra.mxu0 0.0
      %253 = vmatprep.subr.mxu0 0.0
      %254 = vmatpush1.msra.mxu0 0.0
      %255 = vmatprep.subr.mxu0 0.0
      %256 = vmatpush1.msra.mxu0 0.0
      %257 = vmatprep.subr.mxu0 0.0
      %258 = vmatpush1.msra.mxu0 0.0
      %259 = vmatprep.subr.mxu0 0.0
      %260 = vmatpush1.msra.mxu0 0.0
      %261 = vmatprep.subr.mxu0 0.0
      %262 = vmatpush1.msra.mxu0 0.0
      %263 = vmatprep.subr.mxu0 0.0
      %264 = vmatpush1.msra.mxu0 0.0
      %265 = vmatprep.subr.mxu0 0.0
      %266 = vmatpush1.msra.mxu0 0.0
      %267 = vmatprep.subr.mxu0 0.0
      %268 = vmatpush1.msra.mxu0 0.0
      %269 = vmatprep.subr.mxu0 0.0
      %270 = vmatpush1.msra.mxu0 0.0
      %271 = vmatprep.mubr.f32.mxu0 0.0
      %272 = vmatmul.mubr.f32.gmra.mrb[0].mxu0 %v205
      %v273 = vpop.f32.mrb[0].mxu0
      %v274 = vadd.f32 %v201, %v273
      %v275 = vpop.f32.mrb[0].mxu0
      %276 = vdwg.mxu0
      %v277 = vld [vmem:[%s3] sm:$0xff]
      %v278 = vadd.f32 %v274, %v277
      %vm279 = vcmask 261120
      %280 = vst.msk [vmem:[%s192] sm:$0xff] %vm279, %v278
      %p281 = scmp.lt.s32.totalorder %s15, 1
      %s282 = scalar_select %p281, %s15, 1
      %s283 = smul.addr %s282, 8
      %s284 = scalar_lea.vmem %s4, %s283
      // Predicated region
      $region37: #{transformer_link_forward.4} parent=35 // pred_check
        %p285 = pneg %p122
      $region38: #{transformer_link_forward.4} parent=35 // pred_check_branch
        %287 = sbr.rel (%p285) target = $region40
      $region39: #{transformer_link_forward.4} parent=35 // pred_region
        _
      $region40: #{transformer_link_forward.4} parent=35 // pred_fallthru
        _
    $region36: #{transformer_link_forward.4} parent=5 // pred_fallthru
      _
    %p288 = scmp.le.s32.totalorder 2, %s10
    // Predicated region
    $region41: #{transformer_link_forward.4} parent=5 // pred_check
      %p289 = pneg %p288
    $region42: #{transformer_link_forward.4} parent=5 // pred_check_branch
      %291 = sbr.rel (%p289) target = $region44
    $region43: #{transformer_link_forward.4} parent=5 // pred_region
      %s292 = ssub.s32 %s10, 2
      // Predicated region
      $region45: #{transformer_link_forward.4} parent=43 // pred_check
        %p293 = pneg %p128
      $region46: #{transformer_link_forward.4} parent=43 // pred_check_branch
        %295 = sbr.rel (%p293) target = $region48
      $region47: #{transformer_link_forward.4} parent=43 // pred_region
        %p296 = scmp.lt.s32.totalorder %s16, 1
        %s297 = scalar_select %p296, %s16, 1
        %s298 = smul.addr %s297, 8
        %s299 = scalar_lea.vmem %s4, %s298
      $region48: #{transformer_link_forward.4} parent=43 // pred_fallthru
        _
    $region44: #{transformer_link_forward.4} parent=5 // pred_fallthru
      _
  $region6: #{transformer_link_forward.4} parent=0 // loop_footer
    %s14 = sadd.s32 1, %s10
  $region7: #{transformer_link_forward.4} parent=0 // loop_footer_branch
    %9 = sbr.rel target = $region3
  $region8: #{transformer_link_forward.4} parent=0 // loop_exit
    _

// kernel: transformer_link_forward.7
$region0: #{transformer_link_forward.7}
  #allocation0 [shape = 'u32[]', space=smem, size = 0x4, offset = 0x4, fixed_abs, tag = 'smem constant byte address 0x4 - core index']
  #allocation1 [shape = 'u32[144,128]{1,0:T(1,128)}', space=vmem, size = 0x12000, scoped, tag = 'internal scratch']
  %s0 = inlined_call_operand.vmem [shape: f32[2,8,32], index: 0, kind: input, shape index: {}]
  %s1 = inlined_call_operand.vmem [shape: f32[32,8], index: 1, kind: input, shape index: {}]
  %s2 = inlined_call_operand.vmem [shape: f32[1,8], index: 2, kind: input, shape index: {}]
  %s3 = inlined_call_operand.vmem [shape: f32[32,8], index: 3, kind: input, shape index: {}]
  %s4 = inlined_call_operand.vmem [shape: f32[1,8], index: 4, kind: input, shape index: {}]
  %s5 = inlined_call_operand.hbm [shape: f32[2,8,8], index: 5, kind: output, shape index: {0}]
  %s6 = inlined_call_operand.hbm [shape: f32[2,8,8], index: 6, kind: output, shape index: {1}]
  %7 = xla_tuple %s5, %s6
  %s8 = sld [smem:[#allocation0]]
  $region61: #{transformer_link_forward.7} parent=0
    _
  %s10 = ssub.s32 1, %s8
  %s11 = scalar_select 0, %s10, %s8
  $region1: #{transformer_link_forward.7} parent=0
    #allocation2 [shape = 'u8[8192]{0}', space=vmem, size = 0x2000, scoped, tag = 'output window, operand 0']
    #allocation3 [shape = 's32[2]{0}', space=sflag, size = 0x8, scoped, tag = 'scoped memory for transformer_link_forward.7']
    #allocation4 [shape = 'u8[8192]{0}', space=vmem, size = 0x2000, scoped, tag = 'output window, operand 1']
    #allocation5 [shape = 's32[2]{0}', space=sflag, size = 0x8, scoped, tag = 'scoped memory for transformer_link_forward.7']
    %12 = vsyncpa [#allocation3], 0
    %s13 = scalar_lea.sflag [#allocation3], 1
    %14 = vsyncpa %s13, 0
    %15 = vsyncpa [#allocation5], 0
    %s16 = scalar_lea.sflag [#allocation5], 1
    %17 = vsyncpa %s16, 0
    loop: start=0, step=1, limit=4
    $region2: #{transformer_link_forward.7} parent=1 // loop_pre_header
      _
    $region3: #{transformer_link_forward.7} parent=1 // loop_header
      %s19 = sphi 0, %s23
      %p20 = scmp.ge.s32.totalorder %s19, 4
      %s29 = sphi 0, %s31
      %s32 = sphi 0, %s29
      %s33 = sphi 0, %s32
      %s49 = sphi 0, %s33
      %s53 = sphi 0, %s53
      %s55 = sphi 0, %s53
      %s56 = sphi 0, %s55
      %s70 = sphi 0, %s56
      %s74 = sphi 0, %s74
      %s76 = sphi 0, %s74
      %s77 = sphi 0, %s76
      %s91 = sphi 0, %s77
      %s95 = sphi 0, %s95
      %s97 = sphi 0, %s95
      %s98 = sphi 0, %s97
      %s112 = sphi 0, %s98
      %s116 = sphi 0, %s116
      %s118 = sphi 0, %s116
      %s119 = sphi 0, %s118
      %s133 = sphi 0, %s119
      %s139 = sphi 0, %s141
      %s142 = sphi 0, %s139
      %s143 = sphi 0, %s142
      %s159 = sphi 0, %s143
      %s165 = sphi 0, %s167
      %s168 = sphi 0, %s165
      %s169 = sphi 0, %s168
      %s185 = sphi 0, %s169
    $region4: #{transformer_link_forward.7} parent=1 // loop_header_branch
      %22 = sbr.rel (%p20) target = $region8
    $region5: #{transformer_link_forward.7} parent=1 // loop_body
      %s24 = ssub.s32 %s19, 1
      %s25 = ssub.s32 %s19, 2
      %s26 = sadd.s32 %s19, 1
      %s27 = ssub.s32 %s19, %s26
      %p28 = scmp.eq.s32.totalorder %s27, 0
      %s30 = sadd.s32 %s29, 1
      %s31 = scalar_select %p28, %s29, %s30
      %p34 = pneg %p28
      %p35 = scmp.eq.s32.totalorder %s19, 1
      %p36 = por %p34, %p35
      %p37 = scmp.ne.s32.totalorder %s29, %s32
      %p38 = scmp.eq.s32.totalorder %s19, 0
      %p39 = por %p37, %p38
      %p40 = scmp.ne.s32.totalorder %s29, %s32
      %p41 = scmp.eq.s32.totalorder %s24, 1
      %p42 = por %p40, %p41
      %p43 = scmp.ne.s32.totalorder %s32, %s33
      %p44 = scmp.eq.s32.totalorder %s24, 0
      %p45 = por %p43, %p44
      %p46 = scmp.ne.s32.totalorder %s32, %s33
      %p47 = scmp.eq.s32.totalorder %s25, 1
      %p48 = por %p46, %p47
      %p50 = scmp.ne.s32.totalorder %s33, %s49
      %p51 = scmp.eq.s32.totalorder %s25, 0
      %p52 = por %p50, %p51
      %s54 = sadd.s32 %s53, 1
      %p57 = scmp.eq.s32.totalorder %s19, 1
      %p58 = scmp.ne.s32.totalorder %s53, %s55
      %p59 = scmp.eq.s32.totalorder %s19, 0
      %p60 = por %p58, %p59
      %p61 = scmp.ne.s32.totalorder %s53, %s55
      %p62 = scmp.eq.s32.totalorder %s24, 1
      %p63 = por %p61, %p62
      %p64 = scmp.ne.s32.totalorder %s55, %s56
      %p65 = scmp.eq.s32.totalorder %s24, 0
      %p66 = por %p64, %p65
      %p67 = scmp.ne.s32.totalorder %s55, %s56
      %p68 = scmp.eq.s32.totalorder %s25, 1
      %p69 = por %p67, %p68
      %p71 = scmp.ne.s32.totalorder %s56, %s70
      %p72 = scmp.eq.s32.totalorder %s25, 0
      %p73 = por %p71, %p72
      %s75 = sadd.s32 %s74, 1
      %p78 = scmp.eq.s32.totalorder %s19, 1
      %p79 = scmp.ne.s32.totalorder %s74, %s76
      %p80 = scmp.eq.s32.totalorder %s19, 0
      %p81 = por %p79, %p80
      %p82 = scmp.ne.s32.totalorder %s74, %s76
      %p83 = scmp.eq.s32.totalorder %s24, 1
      %p84 = por %p82, %p83
      %p85 = scmp.ne.s32.totalorder %s76, %s77
      %p86 = scmp.eq.s32.totalorder %s24, 0
      %p87 = por %p85, %p86
      %p88 = scmp.ne.s32.totalorder %s76, %s77
      %p89 = scmp.eq.s32.totalorder %s25, 1
      %p90 = por %p88, %p89
      %p92 = scmp.ne.s32.totalorder %s77, %s91
      %p93 = scmp.eq.s32.totalorder %s25, 0
      %p94 = por %p92, %p93
      %s96 = sadd.s32 %s95, 1
      %p99 = scmp.eq.s32.totalorder %s19, 1
      %p100 = scmp.ne.s32.totalorder %s95, %s97
      %p101 = scmp.eq.s32.totalorder %s19, 0
      %p102 = por %p100, %p101
      %p103 = scmp.ne.s32.totalorder %s95, %s97
      %p104 = scmp.eq.s32.totalorder %s24, 1
      %p105 = por %p103, %p104
      %p106 = scmp.ne.s32.totalorder %s97, %s98
      %p107 = scmp.eq.s32.totalorder %s24, 0
      %p108 = por %p106, %p107
      %p109 = scmp.ne.s32.totalorder %s97, %s98
      %p110 = scmp.eq.s32.totalorder %s25, 1
      %p111 = por %p109, %p110
      %p113 = scmp.ne.s32.totalorder %s98, %s112
      %p114 = scmp.eq.s32.totalorder %s25, 0
      %p115 = por %p113, %p114
      %s117 = sadd.s32 %s116, 1
      %p120 = scmp.eq.s32.totalorder %s19, 1
      %p121 = scmp.ne.s32.totalorder %s116, %s118
      %p122 = scmp.eq.s32.totalorder %s19, 0
      %p123 = por %p121, %p122
      %p124 = scmp.ne.s32.totalorder %s116, %s118
      %p125 = scmp.eq.s32.totalorder %s24, 1
      %p126 = por %p124, %p125
      %p127 = scmp.ne.s32.totalorder %s118, %s119
      %p128 = scmp.eq.s32.totalorder %s24, 0
      %p129 = por %p127, %p128
      %p130 = scmp.ne.s32.totalorder %s118, %s119
      %p131 = scmp.eq.s32.totalorder %s25, 1
      %p132 = por %p130, %p131
      %p134 = scmp.ne.s32.totalorder %s119, %s133
      %p135 = scmp.eq.s32.totalorder %s25, 0
      %p136 = por %p134, %p135
      %s137 = ssub.s32 %s19, %s26
      %p138 = scmp.eq.s32.totalorder %s137, 0
      %s140 = sadd.s32 %s139, 1
      %s141 = scalar_select %p138, %s139, %s140
      %p144 = pneg %p138
      %p145 = scmp.eq.s32.totalorder %s19, 1
      %p146 = por %p144, %p145
      %p147 = scmp.ne.s32.totalorder %s139, %s142
      %p148 = scmp.eq.s32.totalorder %s19, 0
      %p149 = por %p147, %p148
      %p150 = scmp.ne.s32.totalorder %s139, %s142
      %p151 = scmp.eq.s32.totalorder %s24, 1
      %p152 = por %p150, %p151
      %p153 = scmp.ne.s32.totalorder %s142, %s143
      %p154 = scmp.eq.s32.totalorder %s24, 0
      %p155 = por %p153, %p154
      %p156 = scmp.ne.s32.totalorder %s142, %s143
      %p157 = scmp.eq.s32.totalorder %s25, 1
      %p158 = por %p156, %p157
      %p160 = scmp.ne.s32.totalorder %s143, %s159
      %p161 = scmp.eq.s32.totalorder %s25, 0
      %p162 = por %p160, %p161
      %s163 = ssub.s32 %s19, %s26
      %p164 = scmp.eq.s32.totalorder %s163, 0
      %s166 = sadd.s32 %s165, 1
      %s167 = scalar_select %p164, %s165, %s166
      %p170 = pneg %p164
      %p171 = scmp.eq.s32.totalorder %s19, 1
      %p172 = por %p170, %p171
      %p173 = scmp.ne.s32.totalorder %s165, %s168
      %p174 = scmp.eq.s32.totalorder %s19, 0
      %p175 = por %p173, %p174
      %p176 = scmp.ne.s32.totalorder %s165, %s168
      %p177 = scmp.eq.s32.totalorder %s24, 1
      %p178 = por %p176, %p177
      %p179 = scmp.ne.s32.totalorder %s168, %s169
      %p180 = scmp.eq.s32.totalorder %s24, 0
      %p181 = por %p179, %p180
      %p182 = scmp.ne.s32.totalorder %s168, %s169
      %p183 = scmp.eq.s32.totalorder %s25, 1
      %p184 = por %p182, %p183
      %p186 = scmp.ne.s32.totalorder %s169, %s185
      %p187 = scmp.eq.s32.totalorder %s25, 0
      %p188 = por %p186, %p187
      %p189 = scmp.le.s32.totalorder 1, %s19
      %p190 = scmp.lt.s32.totalorder %s19, 3
      %p191 = pnand %p189, %p190
      %p192 = pneg %p191
      // Predicated region
      $region9: #{transformer_link_forward.7} parent=5 // pred_check
        _
      $region10: #{transformer_link_forward.7} parent=5 // pred_check_branch
        %194 = sbr.rel (%p191) target = $region12
      $region11: #{transformer_link_forward.7} parent=5 // pred_region
        %s195 = ssub.s32 %s19, 1
        // Predicated region
        $region13: #{transformer_link_forward.7} parent=11 // pred_check
          %p196 = pneg %p66
        $region14: #{transformer_link_forward.7} parent=11 // pred_check_branch
          %198 = sbr.rel (%p196) target = $region16
        $region15: #{transformer_link_forward.7} parent=11 // pred_region
          _
        $region16: #{transformer_link_forward.7} parent=11 // pred_fallthru
          _
        // Predicated region
        $region17: #{transformer_link_forward.7} parent=11 // pred_check
          %p199 = pneg %p87
        $region18: #{transformer_link_forward.7} parent=11 // pred_check_branch
          %201 = sbr.rel (%p199) target = $region20
        $region19: #{transformer_link_forward.7} parent=11 // pred_region
          _
        $region20: #{transformer_link_forward.7} parent=11 // pred_fallthru
          _
        // Predicated region
        $region21: #{transformer_link_forward.7} parent=11 // pred_check
          %p202 = pneg %p108
        $region22: #{transformer_link_forward.7} parent=11 // pred_check_branch
          %204 = sbr.rel (%p202) target = $region24
        $region23: #{transformer_link_forward.7} parent=11 // pred_region
          _
        $region24: #{transformer_link_forward.7} parent=11 // pred_fallthru
          _
        // Predicated region
        $region25: #{transformer_link_forward.7} parent=11 // pred_check
          %p205 = pneg %p129
        $region26: #{transformer_link_forward.7} parent=11 // pred_check_branch
          %207 = sbr.rel (%p205) target = $region28
        $region27: #{transformer_link_forward.7} parent=11 // pred_region
          _
        $region28: #{transformer_link_forward.7} parent=11 // pred_fallthru
          _
      $region12: #{transformer_link_forward.7} parent=5 // pred_fallthru
        _
      %p208 = scmp.lt.s32.totalorder %s19, 2
      // Predicated region
      $region29: #{transformer_link_forward.7} parent=5 // pred_check
        %p209 = pneg %p208
      $region30: #{transformer_link_forward.7} parent=5 // pred_check_branch
        %211 = sbr.rel (%p209) target = $region32
      $region31: #{transformer_link_forward.7} parent=5 // pred_region
        // Predicated region
        $region33: #{transformer_link_forward.7} parent=31 // pred_check
          %p212 = pneg %p39
        $region34: #{transformer_link_forward.7} parent=31 // pred_check_branch
          %214 = sbr.rel (%p212) target = $region36
        $region35: #{transformer_link_forward.7} parent=31 // pred_region
          %p215 = scmp.lt.s32.totalorder %s19, 1
          %s216 = scalar_select %p215, %s19, 1
          %s217 = smul.addr %s216, 8
          %s218 = scalar_lea.vmem %s0, %s217
        $region36: #{transformer_link_forward.7} parent=31 // pred_fallthru
          _
      $region32: #{transformer_link_forward.7} parent=5 // pred_fallthru
        _
      %p219 = scmp.le.s32.totalorder 1, %s19
      %p220 = scmp.lt.s32.totalorder %s19, 3
      %p221 = pnand %p219, %p220
      %p222 = pneg %p221
      // Predicated region
      $region37: #{transformer_link_forward.7} parent=5 // pred_check
        _
      $region38: #{transformer_link_forward.7} parent=5 // pred_check_branch
        %224 = sbr.rel (%p221) target = $region40
      $region39: #{transformer_link_forward.7} parent=5 // pred_region
        %s225 = ssub.s32 %s19, 1
        %p226 = scmp.lt.s32.totalorder %s24, 1
        %s227 = scalar_select %p226, %s24, 1
        %s228 = smul.addr %s227, 8
        %s229 = scalar_lea.vmem %s0, %s228
        %p230 = pneg %p45
        %p231 = pneg %p42
        %p232 = pneg %p66
        %p233 = pneg %p63
        %p234 = pneg %p87
        %p235 = pneg %p84
        %p236 = pneg %p108
        %p237 = pneg %p105
        %p238 = pneg %p129
        %p239 = pneg %p126
        %p240 = pneg %p155
        %p241 = pneg %p152
        %s242 = sand.u32 %s142, 1
        %s243 = scalar_lea.sflag [#allocation3], %s242
        %s244 = sand.u32 %s142, 1
        %s245 = smul.addr %s244, 8
        %s246 = scalar_lea.vmem [#allocation2], %s245
        %p247 = pneg %p181
        %p248 = pneg %p178
        %s249 = sand.u32 %s168, 1
        %s250 = scalar_lea.sflag [#allocation5], %s249
        %s251 = sand.u32 %s168, 1
        %s252 = smul.addr %s251, 8
        %s253 = scalar_lea.vmem [#allocation4], %s252
        %p254 = scmp.lt.s32.totalorder %s24, 1
        %s255 = scalar_select %p254, %s24, 1
        %s256 = smul.addr %s255, 8
        %s257 = scalar_lea.vmem %s0, %s256
        %v258 = vld [vmem:[%s257] sm:$0xff]
        %v259 = vld [vmem:[%s1] sm:$0xff]
        %v260 = vld [vmem:[%s1 + $0x8] sm:$0xff]
        %v261 = vld [vmem:[%s1 + $0x10] sm:$0xff]
        %v262 = vld [vmem:[%s1 + $0x18] sm:$0xff]
        %v263 = vld [vmem:[%s2] sm:$0x1]
        %v265 = vlaneseq
        %v266 = vshrl.u32 %v265, 7
        %v267 = vsub.s32 0, %v266
        %v268 = vrot.slane %v263, %v267
        %vm270 = vcmask 261120
        %v272 = vsel %vm270, %v258, 0
        %274 = vmatprep.subr.mxu0 0.0
        %275 = vmatpush1.msra.mxu0 %v259
        %276 = vmatprep.subr.mxu0 0.0
        %277 = vmatpush1.msra.mxu0 %v260
        %278 = vmatprep.subr.mxu0 0.0
        %279 = vmatpush1.msra.mxu0 %v261
        %280 = vmatprep.subr.mxu0 0.0
        %281 = vmatpush1.msra.mxu0 %v262
        %282 = vmatprep.subr.mxu0 0.0
        %283 = vmatpush1.msra.mxu0 0.0
        %284 = vmatprep.subr.mxu0 0.0
        %285 = vmatpush1.msra.mxu0 0.0
        %286 = vmatprep.subr.mxu0 0.0
        %287 = vmatpush1.msra.mxu0 0.0
        %288 = vmatprep.subr.mxu0 0.0
        %289 = vmatpush1.msra.mxu0 0.0
        %290 = vmatprep.subr.mxu0 0.0
        %291 = vmatpush1.msra.mxu0 0.0
        %292 = vmatprep.subr.mxu0 0.0
        %293 = vmatpush1.msra.mxu0 0.0
        %294 = vmatprep.subr.mxu0 0.0
        %295 = vmatpush1.msra.mxu0 0.0
        %296 = vmatprep.subr.mxu0 0.0
        %297 = vmatpush1.msra.mxu0 0.0
        %298 = vmatprep.subr.mxu0 0.0
        %299 = vmatpush1.msra.mxu0 0.0
        %300 = vmatprep.subr.mxu0 0.0
        %301 = vmatpush1.msra.mxu0 0.0
        %302 = vmatprep.subr.mxu0 0.0
        %303 = vmatpush1.msra.mxu0 0.0
        %304 = vmatprep.subr.mxu0 0.0
        %305 = vmatpush1.msra.mxu0 0.0
        %306 = vmatprep.subr.mxu0 0.0
        %307 = vmatpush1.msra.mxu0 0.0
        %308 = vmatprep.subr.mxu0 0.0
        %309 = vmatpush1.msra.mxu0 0.0
        %310 = vmatprep.subr.mxu0 0.0
        %311 = vmatpush1.msra.mxu0 0.0
        %312 = vmatprep.subr.mxu0 0.0
        %313 = vmatpush1.msra.mxu0 0.0
        %314 = vmatprep.subr.mxu0 0.0
        %315 = vmatpush1.msra.mxu0 0.0
        %316 = vmatprep.subr.mxu0 0.0
        %317 = vmatpush1.msra.mxu0 0.0
        %318 = vmatprep.subr.mxu0 0.0
        %319 = vmatpush1.msra.mxu0 0.0
        %320 = vmatprep.subr.mxu0 0.0
        %321 = vmatpush1.msra.mxu0 0.0
        %322 = vmatprep.subr.mxu0 0.0
        %323 = vmatpush1.msra.mxu0 0.0
        %324 = vmatprep.subr.mxu0 0.0
        %325 = vmatpush1.msra.mxu0 0.0
        %326 = vmatprep.subr.mxu0 0.0
        %327 = vmatpush1.msra.mxu0 0.0
        %328 = vmatprep.subr.mxu0 0.0
        %329 = vmatpush1.msra.mxu0 0.0
        %330 = vmatprep.subr.mxu0 0.0
        %331 = vmatpush1.msra.mxu0 0.0
        %332 = vmatprep.subr.mxu0 0.0
        %333 = vmatpush1.msra.mxu0 0.0
        %334 = vmatprep.subr.mxu0 0.0
        %335 = vmatpush1.msra.mxu0 0.0
        %336 = vmatprep.subr.mxu0 0.0
        %337 = vmatpush1.msra.mxu0 0.0
        %338 = vmatprep.mubr.f32.mxu0 0.0
        %339 = vmatmul.mubr.f32.gmra.mrb[0].mxu0 %v272
        %v340 = vpop.f32.mrb[0].mxu0
        %v341 = vadd.f32 %v268, %v340
        %v342 = vpop.f32.mrb[0].mxu0
        %343 = vdwg.mxu0
        %v344 = vadd.f32 %v341, 1e-08
        %vm345 = vcmask 64512
        %346 = vst.msk [vmem:[%s246] sm:$0xff] %vm345, %v344
        %v347 = vld [vmem:[%s3] sm:$0xff]
        %v348 = vld [vmem:[%s3 + $0x8] sm:$0xff]
        %v349 = vld [vmem:[%s3 + $0x10] sm:$0xff]
        %v350 = vld [vmem:[%s3 + $0x18] sm:$0xff]
        %v351 = vld [vmem:[%s4] sm:$0x1]
        %v353 = vlaneseq
        %v354 = vshrl.u32 %v353, 7
        %v355 = vsub.s32 0, %v354
        %v356 = vrot.slane %v351, %v355
        %358 = vmatprep.subr.mxu0 0.0
        %359 = vmatpush1.msra.mxu0 %v347
        %360 = vmatprep.subr.mxu0 0.0
        %361 = vmatpush1.msra.mxu0 %v348
        %362 = vmatprep.subr.mxu0 0.0
        %363 = vmatpush1.msra.mxu0 %v349
        %364 = vmatprep.subr.mxu0 0.0
        %365 = vmatpush1.msra.mxu0 %v350
        %366 = vmatprep.subr.mxu0 0.0
        %367 = vmatpush1.msra.mxu0 0.0
        %368 = vmatprep.subr.mxu0 0.0
        %369 = vmatpush1.msra.mxu0 0.0
        %370 = vmatprep.subr.mxu0 0.0
        %371 = vmatpush1.msra.mxu0 0.0
        %372 = vmatprep.subr.mxu0 0.0
        %373 = vmatpush1.msra.mxu0 0.0
        %374 = vmatprep.subr.mxu0 0.0
        %375 = vmatpush1.msra.mxu0 0.0
        %376 = vmatprep.subr.mxu0 0.0
        %377 = vmatpush1.msra.mxu0 0.0
        %378 = vmatprep.subr.mxu0 0.0
        %379 = vmatpush1.msra.mxu0 0.0
        %380 = vmatprep.subr.mxu0 0.0
        %381 = vmatpush1.msra.mxu0 0.0
        %382 = vmatprep.subr.mxu0 0.0
        %383 = vmatpush1.msra.mxu0 0.0
        %384 = vmatprep.subr.mxu0 0.0
        %385 = vmatpush1.msra.mxu0 0.0
        %386 = vmatprep.subr.mxu0 0.0
        %387 = vmatpush1.msra.mxu0 0.0
        %388 = vmatprep.subr.mxu0 0.0
        %389 = vmatpush1.msra.mxu0 0.0
        %390 = vmatprep.subr.mxu0 0.0
        %391 = vmatpush1.msra.mxu0 0.0
        %392 = vmatprep.subr.mxu0 0.0
        %393 = vmatpush1.msra.mxu0 0.0
        %394 = vmatprep.subr.mxu0 0.0
        %395 = vmatpush1.msra.mxu0 0.0
        %396 = vmatprep.subr.mxu0 0.0
        %397 = vmatpush1.msra.mxu0 0.0
        %398 = vmatprep.subr.mxu0 0.0
        %399 = vmatpush1.msra.mxu0 0.0
        %400 = vmatprep.subr.mxu0 0.0
        %401 = vmatpush1.msra.mxu0 0.0
        %402 = vmatprep.subr.mxu0 0.0
        %403 = vmatpush1.msra.mxu0 0.0
        %404 = vmatprep.subr.mxu0 0.0
        %405 = vmatpush1.msra.mxu0 0.0
        %406 = vmatprep.subr.mxu0 0.0
        %407 = vmatpush1.msra.mxu0 0.0
        %408 = vmatprep.subr.mxu0 0.0
        %409 = vmatpush1.msra.mxu0 0.0
        %410 = vmatprep.subr.mxu0 0.0
        %411 = vmatpush1.msra.mxu0 0.0
        %412 = vmatprep.subr.mxu0 0.0
        %413 = vmatpush1.msra.mxu0 0.0
        %414 = vmatprep.subr.mxu0 0.0
        %415 = vmatpush1.msra.mxu0 0.0
        %416 = vmatprep.subr.mxu0 0.0
        %417 = vmatpush1.msra.mxu0 0.0
        %418 = vmatprep.subr.mxu0 0.0
        %419 = vmatpush1.msra.mxu0 0.0
        %420 = vmatprep.subr.mxu0 0.0
        %421 = vmatpush1.msra.mxu0 0.0
        %422 = vmatprep.mubr.f32.mxu0 0.0
        %423 = vmatmul.mubr.f32.gmra.mrb[0].mxu0 %v272
        %v424 = vpop.f32.mrb[0].mxu0
        %v425 = vadd.f32 %v356, %v424
        %v426 = vpop.f32.mrb[0].mxu0
        %427 = vdwg.mxu0
        %v428 = vmax.f32 %v425, 0.0
        %v429 = vand.u32 2147483647, %v425
        %v430 = vsub.f32 0.0, %v429
        %v431 = vmul.f32 %v430, 1.442695
        %v432 = vpow.pop %v431
        %v433 = vadd.f32 %v432, 1.0
        %v434 = vlog2.pop %v433
        %v435 = vmul.f32 %v434, 0.6931472
        %v436 = vmul.f32 -0.5, %v432
        %v437 = vadd.f32 %v436, 1.0
        %v438 = vmul.f32 %v437, %v432
        %v439 = vand.u32 2147483647, %v432
        %vm440 = vcmp.lt.f32.partialorder %v439, 0.0004427343
        %v441 = vsel %vm440, %v438, %v435
        %v442 = vadd.f32 %v428, %v441
        %v443 = vadd.f32 %v442, 1e-08
        %444 = vst.msk [vmem:[%s253] sm:$0xff] %vm345, %v443
        %s445 = sand.u32 %s142, 1
        %s446 = scalar_lea.sflag [#allocation3], %s445
        %s447 = sand.u32 %s142, 1
        %s448 = smul.addr %s447, 8
        %s449 = scalar_lea.vmem [#allocation2], %s448
        %s450 = sand.u32 %s168, 1
        %s451 = scalar_lea.sflag [#allocation5], %s450
        %s452 = sand.u32 %s168, 1
        %s453 = smul.addr %s452, 8
        %s454 = scalar_lea.vmem [#allocation4], %s453
        // Predicated region
        $region41: #{transformer_link_forward.7} parent=39 // pred_check
          %p455 = pneg %p152
        $region42: #{transformer_link_forward.7} parent=39 // pred_check_branch
          %457 = sbr.rel (%p455) target = $region44
        $region43: #{transformer_link_forward.7} parent=39 // pred_region
          %s459 = ssub.s32 128, 128
          %460 = vsyncadd %s446, %s459
          %s461 = smul.addr %s24, 128
          %s462 = scalar_lea.hbm %s5, %s461
          %s464 = sshll.u32 %s449, 4
          %s465 = int_to_ptr.vmem [resolvable:$true] %s464
          %467 = dma.vmem_to_hbm [thread:$0]  %s465, 128, %s462, %s446
        $region44: #{transformer_link_forward.7} parent=39 // pred_fallthru
          _
        // Predicated region
        $region45: #{transformer_link_forward.7} parent=39 // pred_check
          %p468 = pneg %p178
        $region46: #{transformer_link_forward.7} parent=39 // pred_check_branch
          %470 = sbr.rel (%p468) target = $region48
        $region47: #{transformer_link_forward.7} parent=39 // pred_region
          %s472 = ssub.s32 128, 128
          %473 = vsyncadd %s451, %s472
          %s474 = smul.addr %s24, 128
          %s475 = scalar_lea.hbm %s6, %s474
          %s477 = sshll.u32 %s454, 4
          %s478 = int_to_ptr.vmem [resolvable:$true] %s477
          %480 = dma.vmem_to_hbm [thread:$0]  %s478, 128, %s475, %s451
        $region48: #{transformer_link_forward.7} parent=39 // pred_fallthru
          _
      $region40: #{transformer_link_forward.7} parent=5 // pred_fallthru
        _
      %p481 = scmp.le.s32.totalorder 2, %s19
      // Predicated region
      $region49: #{transformer_link_forward.7} parent=5 // pred_check
        %p482 = pneg %p481
      $region50: #{transformer_link_forward.7} parent=5 // pred_check_branch
        %484 = sbr.rel (%p482) target = $region52
      $region51: #{transformer_link_forward.7} parent=5 // pred_region
        %s485 = ssub.s32 %s19, 2
        // Predicated region
        $region53: #{transformer_link_forward.7} parent=51 // pred_check
          %p486 = pneg %p158
        $region54: #{transformer_link_forward.7} parent=51 // pred_check_branch
          %488 = sbr.rel (%p486) target = $region56
        $region55: #{transformer_link_forward.7} parent=51 // pred_region
          %s489 = sand.u32 %s143, 1
          %s490 = scalar_lea.sflag [#allocation3], %s489
          %s491 = sand.u32 %s143, 1
          %s492 = smul.addr %s491, 8
          %s493 = scalar_lea.vmem [#allocation2], %s492
          %494 = dma.done %s490, 128
        $region56: #{transformer_link_forward.7} parent=51 // pred_fallthru
          _
        // Predicated region
        $region57: #{transformer_link_forward.7} parent=51 // pred_check
          %p495 = pneg %p184
        $region58: #{transformer_link_forward.7} parent=51 // pred_check_branch
          %497 = sbr.rel (%p495) target = $region60
        $region59: #{transformer_link_forward.7} parent=51 // pred_region
          %s498 = sand.u32 %s169, 1
          %s499 = scalar_lea.sflag [#allocation5], %s498
          %s500 = sand.u32 %s169, 1
          %s501 = smul.addr %s500, 8
          %s502 = scalar_lea.vmem [#allocation4], %s501
          %503 = dma.done %s499, 128
        $region60: #{transformer_link_forward.7} parent=51 // pred_fallthru
          _
      $region52: #{transformer_link_forward.7} parent=5 // pred_fallthru
        _
    $region6: #{transformer_link_forward.7} parent=1 // loop_footer
      %s23 = sadd.s32 1, %s19
    $region7: #{transformer_link_forward.7} parent=1 // loop_footer_branch
      %18 = sbr.rel target = $region3
    $region8: #{transformer_link_forward.7} parent=1 // loop_exit
      _
    %504 = vsyncpa [#allocation3], 1
    %s505 = scalar_lea.sflag [#allocation3], 1
    %506 = vsyncpa %s505, 1
    %507 = vsyncpa [#allocation5], 1
    %s508 = scalar_lea.sflag [#allocation5], 1
    %509 = vsyncpa %s508, 1

// kernel: transformer_link_forward.5
$region0: #{transformer_link_forward.5}
  #allocation0 [shape = 'u32[]', space=smem, size = 0x4, offset = 0x4, fixed_abs, tag = 'smem constant byte address 0x4 - core index']
  #allocation1 [shape = 'u32[144,128]{1,0:T(1,128)}', space=vmem, size = 0x12000, scoped, tag = 'internal scratch']
  %s0 = inlined_call_operand.vmem [shape: f32[2,8,32], index: 0, kind: input, shape index: {}]
  %s1 = inlined_call_operand.vmem [shape: f32[32,96], index: 1, kind: input, shape index: {}]
  %s2 = inlined_call_operand.vmem [shape: f32[1,96], index: 2, kind: input, shape index: {}]
  %s3 = inlined_call_operand.vmem [shape: f32[32,32], index: 3, kind: input, shape index: {}]
  %s4 = inlined_call_operand.vmem [shape: f32[1,32], index: 4, kind: input, shape index: {}]
  %s5 = inlined_call_operand.vmem [shape: f32[1,32], index: 5, kind: input, shape index: {}]
  %s6 = inlined_call_operand.vmem [shape: f32[1,32], index: 6, kind: input, shape index: {}]
  %s7 = inlined_call_operand.vmem [shape: f32[32,32], index: 7, kind: input, shape index: {}]
  %s8 = inlined_call_operand.vmem [shape: f32[1,32], index: 8, kind: input, shape index: {}]
  %s9 = inlined_call_operand.vmem [shape: f32[32,32], index: 9, kind: input, shape index: {}]
  %s10 = inlined_call_operand.vmem [shape: f32[1,32], index: 10, kind: input, shape index: {}]
  %s11 = inlined_call_operand.vmem [shape: f32[1,32], index: 11, kind: input, shape index: {}]
  %s12 = inlined_call_operand.vmem [shape: f32[1,32], index: 12, kind: input, shape index: {}]
  %s13 = inlined_call_operand.vmem [shape: f32[2,8,32], index: 13, kind: output, shape index: {}]
  %s14 = sld [smem:[#allocation0]]
  $region85: #{transformer_link_forward.5} parent=0
    _
  %s16 = ssub.s32 1, %s14
  %s17 = scalar_select 0, %s16, %s14
  loop: start=0, step=1, limit=4
  $region2: #{transformer_link_forward.5} parent=0 // loop_pre_header
    _
  $region3: #{transformer_link_forward.5} parent=0 // loop_header
    %s19 = sphi 0, %s23
    %p20 = scmp.ge.s32.totalorder %s19, 4
    %s29 = sphi 0, %s31
    %s32 = sphi 0, %s29
    %s33 = sphi 0, %s32
    %s49 = sphi 0, %s33
    %s53 = sphi 0, %s53
    %s55 = sphi 0, %s53
    %s56 = sphi 0, %s55
    %s70 = sphi 0, %s56
    %s74 = sphi 0, %s74
    %s76 = sphi 0, %s74
    %s77 = sphi 0, %s76
    %s91 = sphi 0, %s77
    %s95 = sphi 0, %s95
    %s97 = sphi 0, %s95
    %s98 = sphi 0, %s97
    %s112 = sphi 0, %s98
    %s116 = sphi 0, %s116
    %s118 = sphi 0, %s116
    %s119 = sphi 0, %s118
    %s133 = sphi 0, %s119
    %s137 = sphi 0, %s137
    %s139 = sphi 0, %s137
    %s140 = sphi 0, %s139
    %s154 = sphi 0, %s140
    %s158 = sphi 0, %s158
    %s160 = sphi 0, %s158
    %s161 = sphi 0, %s160
    %s175 = sphi 0, %s161
    %s179 = sphi 0, %s179
    %s181 = sphi 0, %s179
    %s182 = sphi 0, %s181
    %s196 = sphi 0, %s182
    %s200 = sphi 0, %s200
    %s202 = sphi 0, %s200
    %s203 = sphi 0, %s202
    %s217 = sphi 0, %s203
    %s221 = sphi 0, %s221
    %s223 = sphi 0, %s221
    %s224 = sphi 0, %s223
    %s238 = sphi 0, %s224
    %s242 = sphi 0, %s242
    %s244 = sphi 0, %s242
    %s245 = sphi 0, %s244
    %s259 = sphi 0, %s245
    %s263 = sphi 0, %s263
    %s265 = sphi 0, %s263
    %s266 = sphi 0, %s265
    %s280 = sphi 0, %s266
    %s284 = sphi 0, %s284
    %s286 = sphi 0, %s284
    %s287 = sphi 0, %s286
    %s301 = sphi 0, %s287
    %s307 = sphi 0, %s309
    %s310 = sphi 0, %s307
    %s311 = sphi 0, %s310
    %s327 = sphi 0, %s311
  $region4: #{transformer_link_forward.5} parent=0 // loop_header_branch
    %22 = sbr.rel (%p20) target = $region8
  $region5: #{transformer_link_forward.5} parent=0 // loop_body
    %s24 = ssub.s32 %s19, 1
    %s25 = ssub.s32 %s19, 2
    %s26 = sadd.s32 %s19, 1
    %s27 = ssub.s32 %s19, %s26
    %p28 = scmp.eq.s32.totalorder %s27, 0
    %s30 = sadd.s32 %s29, 1
    %s31 = scalar_select %p28, %s29, %s30
    %p34 = pneg %p28
    %p35 = scmp.eq.s32.totalorder %s19, 1
    %p36 = por %p34, %p35
    %p37 = scmp.ne.s32.totalorder %s29, %s32
    %p38 = scmp.eq.s32.totalorder %s19, 0
    %p39 = por %p37, %p38
    %p40 = scmp.ne.s32.totalorder %s29, %s32
    %p41 = scmp.eq.s32.totalorder %s24, 1
    %p42 = por %p40, %p41
    %p43 = scmp.ne.s32.totalorder %s32, %s33
    %p44 = scmp.eq.s32.totalorder %s24, 0
    %p45 = por %p43, %p44
    %p46 = scmp.ne.s32.totalorder %s32, %s33
    %p47 = scmp.eq.s32.totalorder %s25, 1
    %p48 = por %p46, %p47
    %p50 = scmp.ne.s32.totalorder %s33, %s49
    %p51 = scmp.eq.s32.totalorder %s25, 0
    %p52 = por %p50, %p51
    %s54 = sadd.s32 %s53, 1
    %p57 = scmp.eq.s32.totalorder %s19, 1
    %p58 = scmp.ne.s32.totalorder %s53, %s55
    %p59 = scmp.eq.s32.totalorder %s19, 0
    %p60 = por %p58, %p59
    %p61 = scmp.ne.s32.totalorder %s53, %s55
    %p62 = scmp.eq.s32.totalorder %s24, 1
    %p63 = por %p61, %p62
    %p64 = scmp.ne.s32.totalorder %s55, %s56
    %p65 = scmp.eq.s32.totalorder %s24, 0
    %p66 = por %p64, %p65
    %p67 = scmp.ne.s32.totalorder %s55, %s56
    %p68 = scmp.eq.s32.totalorder %s25, 1
    %p69 = por %p67, %p68
    %p71 = scmp.ne.s32.totalorder %s56, %s70
    %p72 = scmp.eq.s32.totalorder %s25, 0
    %p73 = por %p71, %p72
    %s75 = sadd.s32 %s74, 1
    %p78 = scmp.eq.s32.totalorder %s19, 1
    %p79 = scmp.ne.s32.totalorder %s74, %s76
    %p80 = scmp.eq.s32.totalorder %s19, 0
    %p81 = por %p79, %p80
    %p82 = scmp.ne.s32.totalorder %s74, %s76
    %p83 = scmp.eq.s32.totalorder %s24, 1
    %p84 = por %p82, %p83
    %p85 = scmp.ne.s32.totalorder %s76, %s77
    %p86 = scmp.eq.s32.totalorder %s24, 0
    %p87 = por %p85, %p86
    %p88 = scmp.ne.s32.totalorder %s76, %s77
    %p89 = scmp.eq.s32.totalorder %s25, 1
    %p90 = por %p88, %p89
    %p92 = scmp.ne.s32.totalorder %s77, %s91
    %p93 = scmp.eq.s32.totalorder %s25, 0
    %p94 = por %p92, %p93
    %s96 = sadd.s32 %s95, 1
    %p99 = scmp.eq.s32.totalorder %s19, 1
    %p100 = scmp.ne.s32.totalorder %s95, %s97
    %p101 = scmp.eq.s32.totalorder %s19, 0
    %p102 = por %p100, %p101
    %p103 = scmp.ne.s32.totalorder %s95, %s97
    %p104 = scmp.eq.s32.totalorder %s24, 1
    %p105 = por %p103, %p104
    %p106 = scmp.ne.s32.totalorder %s97, %s98
    %p107 = scmp.eq.s32.totalorder %s24, 0
    %p108 = por %p106, %p107
    %p109 = scmp.ne.s32.totalorder %s97, %s98
    %p110 = scmp.eq.s32.totalorder %s25, 1
    %p111 = por %p109, %p110
    %p113 = scmp.ne.s32.totalorder %s98, %s112
    %p114 = scmp.eq.s32.totalorder %s25, 0
    %p115 = por %p113, %p114
    %s117 = sadd.s32 %s116, 1
    %p120 = scmp.eq.s32.totalorder %s19, 1
    %p121 = scmp.ne.s32.totalorder %s116, %s118
    %p122 = scmp.eq.s32.totalorder %s19, 0
    %p123 = por %p121, %p122
    %p124 = scmp.ne.s32.totalorder %s116, %s118
    %p125 = scmp.eq.s32.totalorder %s24, 1
    %p126 = por %p124, %p125
    %p127 = scmp.ne.s32.totalorder %s118, %s119
    %p128 = scmp.eq.s32.totalorder %s24, 0
    %p129 = por %p127, %p128
    %p130 = scmp.ne.s32.totalorder %s118, %s119
    %p131 = scmp.eq.s32.totalorder %s25, 1
    %p132 = por %p130, %p131
    %p134 = scmp.ne.s32.totalorder %s119, %s133
    %p135 = scmp.eq.s32.totalorder %s25, 0
    %p136 = por %p134, %p135
    %s138 = sadd.s32 %s137, 1
    %p141 = scmp.eq.s32.totalorder %s19, 1
    %p142 = scmp.ne.s32.totalorder %s137, %s139
    %p143 = scmp.eq.s32.totalorder %s19, 0
    %p144 = por %p142, %p143
    %p145 = scmp.ne.s32.totalorder %s137, %s139
    %p146 = scmp.eq.s32.totalorder %s24, 1
    %p147 = por %p145, %p146
    %p148 = scmp.ne.s32.totalorder %s139, %s140
    %p149 = scmp.eq.s32.totalorder %s24, 0
    %p150 = por %p148, %p149
    %p151 = scmp.ne.s32.totalorder %s139, %s140
    %p152 = scmp.eq.s32.totalorder %s25, 1
    %p153 = por %p151, %p152
    %p155 = scmp.ne.s32.totalorder %s140, %s154
    %p156 = scmp.eq.s32.totalorder %s25, 0
    %p157 = por %p155, %p156
    %s159 = sadd.s32 %s158, 1
    %p162 = scmp.eq.s32.totalorder %s19, 1
    %p163 = scmp.ne.s32.totalorder %s158, %s160
    %p164 = scmp.eq.s32.totalorder %s19, 0
    %p165 = por %p163, %p164
    %p166 = scmp.ne.s32.totalorder %s158, %s160
    %p167 = scmp.eq.s32.totalorder %s24, 1
    %p168 = por %p166, %p167
    %p169 = scmp.ne.s32.totalorder %s160, %s161
    %p170 = scmp.eq.s32.totalorder %s24, 0
    %p171 = por %p169, %p170
    %p172 = scmp.ne.s32.totalorder %s160, %s161
    %p173 = scmp.eq.s32.totalorder %s25, 1
    %p174 = por %p172, %p173
    %p176 = scmp.ne.s32.totalorder %s161, %s175
    %p177 = scmp.eq.s32.totalorder %s25, 0
    %p178 = por %p176, %p177
    %s180 = sadd.s32 %s179, 1
    %p183 = scmp.eq.s32.totalorder %s19, 1
    %p184 = scmp.ne.s32.totalorder %s179, %s181
    %p185 = scmp.eq.s32.totalorder %s19, 0
    %p186 = por %p184, %p185
    %p187 = scmp.ne.s32.totalorder %s179, %s181
    %p188 = scmp.eq.s32.totalorder %s24, 1
    %p189 = por %p187, %p188
    %p190 = scmp.ne.s32.totalorder %s181, %s182
    %p191 = scmp.eq.s32.totalorder %s24, 0
    %p192 = por %p190, %p191
    %p193 = scmp.ne.s32.totalorder %s181, %s182
    %p194 = scmp.eq.s32.totalorder %s25, 1
    %p195 = por %p193, %p194
    %p197 = scmp.ne.s32.totalorder %s182, %s196
    %p198 = scmp.eq.s32.totalorder %s25, 0
    %p199 = por %p197, %p198
    %s201 = sadd.s32 %s200, 1
    %p204 = scmp.eq.s32.totalorder %s19, 1
    %p205 = scmp.ne.s32.totalorder %s200, %s202
    %p206 = scmp.eq.s32.totalorder %s19, 0
    %p207 = por %p205, %p206
    %p208 = scmp.ne.s32.totalorder %s200, %s202
    %p209 = scmp.eq.s32.totalorder %s24, 1
    %p210 = por %p208, %p209
    %p211 = scmp.ne.s32.totalorder %s202, %s203
    %p212 = scmp.eq.s32.totalorder %s24, 0
    %p213 = por %p211, %p212
    %p214 = scmp.ne.s32.totalorder %s202, %s203
    %p215 = scmp.eq.s32.totalorder %s25, 1
    %p216 = por %p214, %p215
    %p218 = scmp.ne.s32.totalorder %s203, %s217
    %p219 = scmp.eq.s32.totalorder %s25, 0
    %p220 = por %p218, %p219
    %s222 = sadd.s32 %s221, 1
    %p225 = scmp.eq.s32.totalorder %s19, 1
    %p226 = scmp.ne.s32.totalorder %s221, %s223
    %p227 = scmp.eq.s32.totalorder %s19, 0
    %p228 = por %p226, %p227
    %p229 = scmp.ne.s32.totalorder %s221, %s223
    %p230 = scmp.eq.s32.totalorder %s24, 1
    %p231 = por %p229, %p230
    %p232 = scmp.ne.s32.totalorder %s223, %s224
    %p233 = scmp.eq.s32.totalorder %s24, 0
    %p234 = por %p232, %p233
    %p235 = scmp.ne.s32.totalorder %s223, %s224
    %p236 = scmp.eq.s32.totalorder %s25, 1
    %p237 = por %p235, %p236
    %p239 = scmp.ne.s32.totalorder %s224, %s238
    %p240 = scmp.eq.s32.totalorder %s25, 0
    %p241 = por %p239, %p240
    %s243 = sadd.s32 %s242, 1
    %p246 = scmp.eq.s32.totalorder %s19, 1
    %p247 = scmp.ne.s32.totalorder %s242, %s244
    %p248 = scmp.eq.s32.totalorder %s19, 0
    %p249 = por %p247, %p248
    %p250 = scmp.ne.s32.totalorder %s242, %s244
    %p251 = scmp.eq.s32.totalorder %s24, 1
    %p252 = por %p250, %p251
    %p253 = scmp.ne.s32.totalorder %s244, %s245
    %p254 = scmp.eq.s32.totalorder %s24, 0
    %p255 = por %p253, %p254
    %p256 = scmp.ne.s32.totalorder %s244, %s245
    %p257 = scmp.eq.s32.totalorder %s25, 1
    %p258 = por %p256, %p257
    %p260 = scmp.ne.s32.totalorder %s245, %s259
    %p261 = scmp.eq.s32.totalorder %s25, 0
    %p262 = por %p260, %p261
    %s264 = sadd.s32 %s263, 1
    %p267 = scmp.eq.s32.totalorder %s19, 1
    %p268 = scmp.ne.s32.totalorder %s263, %s265
    %p269 = scmp.eq.s32.totalorder %s19, 0
    %p270 = por %p268, %p269
    %p271 = scmp.ne.s32.totalorder %s263, %s265
    %p272 = scmp.eq.s32.totalorder %s24, 1
    %p273 = por %p271, %p272
    %p274 = scmp.ne.s32.totalorder %s265, %s266
    %p275 = scmp.eq.s32.totalorder %s24, 0
    %p276 = por %p274, %p275
    %p277 = scmp.ne.s32.totalorder %s265, %s266
    %p278 = scmp.eq.s32.totalorder %s25, 1
    %p279 = por %p277, %p278
    %p281 = scmp.ne.s32.totalorder %s266, %s280
    %p282 = scmp.eq.s32.totalorder %s25, 0
    %p283 = por %p281, %p282
    %s285 = sadd.s32 %s284, 1
    %p288 = scmp.eq.s32.totalorder %s19, 1
    %p289 = scmp.ne.s32.totalorder %s284, %s286
    %p290 = scmp.eq.s32.totalorder %s19, 0
    %p291 = por %p289, %p290
    %p292 = scmp.ne.s32.totalorder %s284, %s286
    %p293 = scmp.eq.s32.totalorder %s24, 1
    %p294 = por %p292, %p293
    %p295 = scmp.ne.s32.totalorder %s286, %s287
    %p296 = scmp.eq.s32.totalorder %s24, 0
    %p297 = por %p295, %p296
    %p298 = scmp.ne.s32.totalorder %s286, %s287
    %p299 = scmp.eq.s32.totalorder %s25, 1
    %p300 = por %p298, %p299
    %p302 = scmp.ne.s32.totalorder %s287, %s301
    %p303 = scmp.eq.s32.totalorder %s25, 0
    %p304 = por %p302, %p303
    %s305 = ssub.s32 %s19, %s26
    %p306 = scmp.eq.s32.totalorder %s305, 0
    %s308 = sadd.s32 %s307, 1
    %s309 = scalar_select %p306, %s307, %s308
    %p312 = pneg %p306
    %p313 = scmp.eq.s32.totalorder %s19, 1
    %p314 = por %p312, %p313
    %p315 = scmp.ne.s32.totalorder %s307, %s310
    %p316 = scmp.eq.s32.totalorder %s19, 0
    %p317 = por %p315, %p316
    %p318 = scmp.ne.s32.totalorder %s307, %s310
    %p319 = scmp.eq.s32.totalorder %s24, 1
    %p320 = por %p318, %p319
    %p321 = scmp.ne.s32.totalorder %s310, %s311
    %p322 = scmp.eq.s32.totalorder %s24, 0
    %p323 = por %p321, %p322
    %p324 = scmp.ne.s32.totalorder %s310, %s311
    %p325 = scmp.eq.s32.totalorder %s25, 1
    %p326 = por %p324, %p325
    %p328 = scmp.ne.s32.totalorder %s311, %s327
    %p329 = scmp.eq.s32.totalorder %s25, 0
    %p330 = por %p328, %p329
    %p331 = scmp.le.s32.totalorder 1, %s19
    %p332 = scmp.lt.s32.totalorder %s19, 3
    %p333 = pnand %p331, %p332
    %p334 = pneg %p333
    // Predicated region
    $region9: #{transformer_link_forward.5} parent=5 // pred_check
      _
    $region10: #{transformer_link_forward.5} parent=5 // pred_check_branch
      %336 = sbr.rel (%p333) target = $region12
    $region11: #{transformer_link_forward.5} parent=5 // pred_region
      %s337 = ssub.s32 %s19, 1
      // Predicated region
      $region13: #{transformer_link_forward.5} parent=11 // pred_check
        %p338 = pneg %p66
      $region14: #{transformer_link_forward.5} parent=11 // pred_check_branch
        %340 = sbr.rel (%p338) target = $region16
      $region15: #{transformer_link_forward.5} parent=11 // pred_region
        _
      $region16: #{transformer_link_forward.5} parent=11 // pred_fallthru
        _
      // Predicated region
      $region17: #{transformer_link_forward.5} parent=11 // pred_check
        %p341 = pneg %p87
      $region18: #{transformer_link_forward.5} parent=11 // pred_check_branch
        %343 = sbr.rel (%p341) target = $region20
      $region19: #{transformer_link_forward.5} parent=11 // pred_region
        _
      $region20: #{transformer_link_forward.5} parent=11 // pred_fallthru
        _
      // Predicated region
      $region21: #{transformer_link_forward.5} parent=11 // pred_check
        %p344 = pneg %p108
      $region22: #{transformer_link_forward.5} parent=11 // pred_check_branch
        %346 = sbr.rel (%p344) target = $region24
      $region23: #{transformer_link_forward.5} parent=11 // pred_region
        _
      $region24: #{transformer_link_forward.5} parent=11 // pred_fallthru
        _
      // Predicated region
      $region25: #{transformer_link_forward.5} parent=11 // pred_check
        %p347 = pneg %p129
      $region26: #{transformer_link_forward.5} parent=11 // pred_check_branch
        %349 = sbr.rel (%p347) target = $region28
      $region27: #{transformer_link_forward.5} parent=11 // pred_region
        _
      $region28: #{transformer_link_forward.5} parent=11 // pred_fallthru
        _
      // Predicated region
      $region29: #{transformer_link_forward.5} parent=11 // pred_check
        %p350 = pneg %p150
      $region30: #{transformer_link_forward.5} parent=11 // pred_check_branch
        %352 = sbr.rel (%p350) target = $region32
      $region31: #{transformer_link_forward.5} parent=11 // pred_region
        _
      $region32: #{transformer_link_forward.5} parent=11 // pred_fallthru
        _
      // Predicated region
      $region33: #{transformer_link_forward.5} parent=11 // pred_check
        %p353 = pneg %p171
      $region34: #{transformer_link_forward.5} parent=11 // pred_check_branch
        %355 = sbr.rel (%p353) target = $region36
      $region35: #{transformer_link_forward.5} parent=11 // pred_region
        _
      $region36: #{transformer_link_forward.5} parent=11 // pred_fallthru
        _
      // Predicated region
      $region37: #{transformer_link_forward.5} parent=11 // pred_check
        %p356 = pneg %p192
      $region38: #{transformer_link_forward.5} parent=11 // pred_check_branch
        %358 = sbr.rel (%p356) target = $region40
      $region39: #{transformer_link_forward.5} parent=11 // pred_region
        _
      $region40: #{transformer_link_forward.5} parent=11 // pred_fallthru
        _
      // Predicated region
      $region41: #{transformer_link_forward.5} parent=11 // pred_check
        %p359 = pneg %p213
      $region42: #{transformer_link_forward.5} parent=11 // pred_check_branch
        %361 = sbr.rel (%p359) target = $region44
      $region43: #{transformer_link_forward.5} parent=11 // pred_region
        _
      $region44: #{transformer_link_forward.5} parent=11 // pred_fallthru
        _
      // Predicated region
      $region45: #{transformer_link_forward.5} parent=11 // pred_check
        %p362 = pneg %p234
      $region46: #{transformer_link_forward.5} parent=11 // pred_check_branch
        %364 = sbr.rel (%p362) target = $region48
      $region47: #{transformer_link_forward.5} parent=11 // pred_region
        _
      $region48: #{transformer_link_forward.5} parent=11 // pred_fallthru
        _
      // Predicated region
      $region49: #{transformer_link_forward.5} parent=11 // pred_check
        %p365 = pneg %p255
      $region50: #{transformer_link_forward.5} parent=11 // pred_check_branch
        %367 = sbr.rel (%p365) target = $region52
      $region51: #{transformer_link_forward.5} parent=11 // pred_region
        _
      $region52: #{transformer_link_forward.5} parent=11 // pred_fallthru
        _
      // Predicated region
      $region53: #{transformer_link_forward.5} parent=11 // pred_check
        %p368 = pneg %p276
      $region54: #{transformer_link_forward.5} parent=11 // pred_check_branch
        %370 = sbr.rel (%p368) target = $region56
      $region55: #{transformer_link_forward.5} parent=11 // pred_region
        _
      $region56: #{transformer_link_forward.5} parent=11 // pred_fallthru
        _
      // Predicated region
      $region57: #{transformer_link_forward.5} parent=11 // pred_check
        %p371 = pneg %p297
      $region58: #{transformer_link_forward.5} parent=11 // pred_check_branch
        %373 = sbr.rel (%p371) target = $region60
      $region59: #{transformer_link_forward.5} parent=11 // pred_region
        _
      $region60: #{transformer_link_forward.5} parent=11 // pred_fallthru
        _
    $region12: #{transformer_link_forward.5} parent=5 // pred_fallthru
      _
    %p374 = scmp.lt.s32.totalorder %s19, 2
    // Predicated region
    $region61: #{transformer_link_forward.5} parent=5 // pred_check
      %p375 = pneg %p374
    $region62: #{transformer_link_forward.5} parent=5 // pred_check_branch
      %377 = sbr.rel (%p375) target = $region64
    $region63: #{transformer_link_forward.5} parent=5 // pred_region
      // Predicated region
      $region65: #{transformer_link_forward.5} parent=63 // pred_check
        %p378 = pneg %p39
      $region66: #{transformer_link_forward.5} parent=63 // pred_check_branch
        %380 = sbr.rel (%p378) target = $region68
      $region67: #{transformer_link_forward.5} parent=63 // pred_region
        %p381 = scmp.lt.s32.totalorder %s19, 1
        %s382 = scalar_select %p381, %s19, 1
        %s383 = smul.addr %s382, 8
        %s384 = scalar_lea.vmem %s0, %s383
      $region68: #{transformer_link_forward.5} parent=63 // pred_fallthru
        _
    $region64: #{transformer_link_forward.5} parent=5 // pred_fallthru
      _
    %p385 = scmp.le.s32.totalorder 1, %s19
    %p386 = scmp.lt.s32.totalorder %s19, 3
    %p387 = pnand %p385, %p386
    %p388 = pneg %p387
    // Predicated region
    $region69: #{transformer_link_forward.5} parent=5 // pred_check
      _
    $region70: #{transformer_link_forward.5} parent=5 // pred_check_branch
      %390 = sbr.rel (%p387) target = $region72
    $region71: #{transformer_link_forward.5} parent=5 // pred_region
      %s391 = ssub.s32 %s19, 1
      %p392 = scmp.lt.s32.totalorder %s24, 1
      %s393 = scalar_select %p392, %s24, 1
      %s394 = smul.addr %s393, 8
      %s395 = scalar_lea.vmem %s0, %s394
      %p396 = pneg %p45
      %p397 = pneg %p42
      %p398 = pneg %p66
      %p399 = pneg %p63
      %p400 = pneg %p87
      %p401 = pneg %p84
      %p402 = pneg %p108
      %p403 = pneg %p105
      %p404 = pneg %p129
      %p405 = pneg %p126
      %p406 = pneg %p150
      %p407 = pneg %p147
      %p408 = pneg %p171
      %p409 = pneg %p168
      %p410 = pneg %p192
      %p411 = pneg %p189
      %p412 = pneg %p213
      %p413 = pneg %p210
      %p414 = pneg %p234
      %p415 = pneg %p231
      %p416 = pneg %p255
      %p417 = pneg %p252
      %p418 = pneg %p276
      %p419 = pneg %p273
      %p420 = pneg %p297
      %p421 = pneg %p294
      %p422 = pneg %p323
      %p423 = pneg %p320
      %p424 = scmp.lt.s32.totalorder %s24, 1
      %s425 = scalar_select %p424, %s24, 1
      %s426 = smul.addr %s425, 8
      %s427 = scalar_lea.vmem %s13, %s426
      %p428 = scmp.lt.s32.totalorder %s24, 1
      %s429 = scalar_select %p428, %s24, 1
      %s430 = smul.addr %s429, 8
      %s431 = scalar_lea.vmem %s0, %s430
      %p432 = scmp.lt.s32.totalorder %s24, 1
      %s433 = scalar_select %p432, %s24, 1
      %s434 = smul.addr %s433, 8
      %s435 = scalar_lea.vmem %s13, %s434
      %v436 = vld [vmem:[%s431] sm:$0xff]
      %v437 = vld [vmem:[%s1] sm:$0xff]
      %v438 = vld [vmem:[%s1 + $0x8] sm:$0xff]
      %v439 = vld [vmem:[%s1 + $0x10] sm:$0xff]
      %v440 = vld [vmem:[%s1 + $0x18] sm:$0xff]
      %v441 = vld [vmem:[%s2] sm:$0x1]
      %v443 = vlaneseq
      %v444 = vshrl.u32 %v443, 7
      %v445 = vsub.s32 0, %v444
      %v446 = vrot.slane %v441, %v445
      %vm448 = vcmask 261120
      %v450 = vsel %vm448, %v436, 0
      %452 = vmatprep.subr.mxu0 0.0
      %453 = vmatpush1.msra.mxu0 %v437
      %454 = vmatprep.subr.mxu0 0.0
      %455 = vmatpush1.msra.mxu0 %v438
      %456 = vmatprep.subr.mxu0 0.0
      %457 = vmatpush1.msra.mxu0 %v439
      %458 = vmatprep.subr.mxu0 0.0
      %459 = vmatpush1.msra.mxu0 %v440
      %460 = vmatprep.subr.mxu0 0.0
      %461 = vmatpush1.msra.mxu0 0.0
      %462 = vmatprep.subr.mxu0 0.0
      %463 = vmatpush1.msra.mxu0 0.0
      %464 = vmatprep.subr.mxu0 0.0
      %465 = vmatpush1.msra.mxu0 0.0
      %466 = vmatprep.subr.mxu0 0.0
      %467 = vmatpush1.msra.mxu0 0.0
      %468 = vmatprep.subr.mxu0 0.0
      %469 = vmatpush1.msra.mxu0 0.0
      %470 = vmatprep.subr.mxu0 0.0
      %471 = vmatpush1.msra.mxu0 0.0
      %472 = vmatprep.subr.mxu0 0.0
      %473 = vmatpush1.msra.mxu0 0.0
      %474 = vmatprep.subr.mxu0 0.0
      %475 = vmatpush1.msra.mxu0 0.0
      %476 = vmatprep.subr.mxu0 0.0
      %477 = vmatpush1.msra.mxu0 0.0
      %478 = vmatprep.subr.mxu0 0.0
      %479 = vmatpush1.msra.mxu0 0.0
      %480 = vmatprep.subr.mxu0 0.0
      %481 = vmatpush1.msra.mxu0 0.0
      %482 = vmatprep.subr.mxu0 0.0
      %483 = vmatpush1.msra.mxu0 0.0
      %484 = vmatprep.subr.mxu0 0.0
      %485 = vmatpush1.msra.mxu0 0.0
      %486 = vmatprep.subr.mxu0 0.0
      %487 = vmatpush1.msra.mxu0 0.0
      %488 = vmatprep.subr.mxu0 0.0
      %489 = vmatpush1.msra.mxu0 0.0
      %490 = vmatprep.subr.mxu0 0.0
      %491 = vmatpush1.msra.mxu0 0.0
      %492 = vmatprep.subr.mxu0 0.0
      %493 = vmatpush1.msra.mxu0 0.0
      %494 = vmatprep.subr.mxu0 0.0
      %495 = vmatpush1.msra.mxu0 0.0
      %496 = vmatprep.subr.mxu0 0.0
      %497 = vmatpush1.msra.mxu0 0.0
      %498 = vmatprep.subr.mxu0 0.0
      %499 = vmatpush1.msra.mxu0 0.0
      %500 = vmatprep.subr.mxu0 0.0
      %501 = vmatpush1.msra.mxu0 0.0
      %502 = vmatprep.subr.mxu0 0.0
      %503 = vmatpush1.msra.mxu0 0.0
      %504 = vmatprep.subr.mxu0 0.0
      %505 = vmatpush1.msra.mxu0 0.0
      %506 = vmatprep.subr.mxu0 0.0
      %507 = vmatpush1.msra.mxu0 0.0
      %508 = vmatprep.subr.mxu0 0.0
      %509 = vmatpush1.msra.mxu0 0.0
      %510 = vmatprep.subr.mxu0 0.0
      %511 = vmatpush1.msra.mxu0 0.0
      %512 = vmatprep.subr.mxu0 0.0
      %513 = vmatpush1.msra.mxu0 0.0
      %514 = vmatprep.subr.mxu0 0.0
      %515 = vmatpush1.msra.mxu0 0.0
      %516 = vmatprep.mubr.f32.mxu0 0.0
      %517 = vmatmul.mubr.f32.gmra.mrb[0].mxu0 %v450
      %v518 = vpop.f32.mrb[0].mxu0
      %v519 = vadd.f32 %v446, %v518
      %v520 = vpop.f32.mrb[0].mxu0
      %521 = vdwg.mxu0
      %v522 = vlaneseq
      %v523 = vshrl.u32 %v522, 7
      %v524 = vlaneseq
      %v525 = vand.u32 %v524, 127
      %vm526 = vcmp.le.s32.totalorder %v525, %v523
      %v527 = vld [vmem:[%s3] sm:$0xff]
      %v528 = vld [vmem:[%s3 + $0x8] sm:$0xff]
      %v529 = vld [vmem:[%s3 + $0x10] sm:$0xff]
      %v530 = vld [vmem:[%s3 + $0x18] sm:$0xff]
      %v531 = vld [vmem:[%s4] sm:$0x1]
      %533 = vrot.lane.b32.xlu0 %v519, 96
      %v534 = vpop.permute.xlu0 %533
      %vm535 = vcmask 130048
      %v536 = vsel %vm535, %v519, 0
      %v538 = vsel %vm535, %v534, 0
      %540 = vmatprep.subr.mxu0 0.0
      %541 = vmatpush1.xpose.msra.mxu0 %v538
      %542 = vmatprep.subr.mxu0 0.0
      %543 = vmatpush1.xpose.msra.mxu0 0.0
      %544 = vmatprep.subr.mxu0 0.0
      %545 = vmatpush1.xpose.msra.mxu0 0.0
      %546 = vmatprep.subr.mxu0 0.0
      %547 = vmatpush1.xpose.msra.mxu0 0.0
      %548 = vmatprep.subr.mxu0 0.0
      %549 = vmatpush1.xpose.msra.mxu0 0.0
      %550 = vmatprep.subr.mxu0 0.0
      %551 = vmatpush1.xpose.msra.mxu0 0.0
      %552 = vmatprep.subr.mxu0 0.0
      %553 = vmatpush1.xpose.msra.mxu0 0.0
      %554 = vmatprep.subr.mxu0 0.0
      %555 = vmatpush1.xpose.msra.mxu0 0.0
      %556 = vmatprep.subr.mxu0 0.0
      %557 = vmatpush1.xpose.msra.mxu0 0.0
      %558 = vmatprep.subr.mxu0 0.0
      %559 = vmatpush1.xpose.msra.mxu0 0.0
      %560 = vmatprep.subr.mxu0 0.0
      %561 = vmatpush1.xpose.msra.mxu0 0.0
      %562 = vmatprep.subr.mxu0 0.0
      %563 = vmatpush1.xpose.msra.mxu0 0.0
      %564 = vmatprep.subr.mxu0 0.0
      %565 = vmatpush1.xpose.msra.mxu0 0.0
      %566 = vmatprep.subr.mxu0 0.0
      %567 = vmatpush1.xpose.msra.mxu0 0.0
      %568 = vmatprep.subr.mxu0 0.0
      %569 = vmatpush1.xpose.msra.mxu0 0.0
      %570 = vmatprep.subr.mxu0 0.0
      %571 = vmatpush1.xpose.msra.mxu0 0.0
      %572 = vmatprep.subr.mxu0 0.0
      %573 = vmatpush1.xpose.msra.mxu0 0.0
      %574 = vmatprep.subr.mxu0 0.0
      %575 = vmatpush1.xpose.msra.mxu0 0.0
      %576 = vmatprep.subr.mxu0 0.0
      %577 = vmatpush1.xpose.msra.mxu0 0.0
      %578 = vmatprep.subr.mxu0 0.0
      %579 = vmatpush1.xpose.msra.mxu0 0.0
      %580 = vmatprep.subr.mxu0 0.0
      %581 = vmatpush1.xpose.msra.mxu0 0.0
      %582 = vmatprep.subr.mxu0 0.0
      %583 = vmatpush1.xpose.msra.mxu0 0.0
      %584 = vmatprep.subr.mxu0 0.0
      %585 = vmatpush1.xpose.msra.mxu0 0.0
      %586 = vmatprep.subr.mxu0 0.0
      %587 = vmatpush1.xpose.msra.mxu0 0.0
      %588 = vmatprep.subr.mxu0 0.0
      %589 = vmatpush1.xpose.msra.mxu0 0.0
      %590 = vmatprep.subr.mxu0 0.0
      %591 = vmatpush1.xpose.msra.mxu0 0.0
      %592 = vmatprep.subr.mxu0 0.0
      %593 = vmatpush1.xpose.msra.mxu0 0.0
      %594 = vmatprep.subr.mxu0 0.0
      %595 = vmatpush1.xpose.msra.mxu0 0.0
      %596 = vmatprep.subr.mxu0 0.0
      %597 = vmatpush1.xpose.msra.mxu0 0.0
      %598 = vmatprep.subr.mxu0 0.0
      %599 = vmatpush1.xpose.msra.mxu0 0.0
      %600 = vmatprep.subr.mxu0 0.0
      %601 = vmatpush1.xpose.msra.mxu0 0.0
      %602 = vmatprep.subr.mxu0 0.0
      %603 = vmatpush1.xpose.msra.mxu0 0.0
      %604 = vmatprep.mubr.f32.mxu0 0.0
      %605 = vmatmul.mubr.f32.gmra.mrb[0].mxu0 %v536
      %v606 = vpop.f32.mrb[0].mxu0
      %v607 = vadd.f32 0.0, %v606
      %v608 = vpop.f32.mrb[0].mxu0
      %609 = vdwg.mxu0
      %v610 = vmul.f32 %v607, 0.25
      %v611 = vsel %vm526, %v610, -1e+30
      %vm612 = vcmask 64512
      %v613 = vsel %vm612, %v611, -inf
      %614 = vmax.xlane.f32.xlu0 %v613
      %v615 = vpop.xlane.xlu0 %614
      %v616 = vsub.f32 %v611, %v615
      %v617 = vmul.f32 %v616, 1.442695
      %v618 = vpow.pop %v617
      %v619 = vsel %vm612, %v618, 0.0
      %620 = vadd.xlane.f32.xlu0 %v619
      %v621 = vpop.xlane.xlu0 %620
      %v622 = vrcp.pop %v621
      %v623 = vmul.f32 %v618, %v622
      %624 = vrot.lane.b32.xlu0 %v519, 64
      %v625 = vpop.permute.xlu0 %624
      %v628 = vsel %vm612, %v623, 0
      %630 = vmatprep.subr.mxu0 0.0
      %631 = vmatpush1.msra.mxu0 %v625
      %632 = vmatprep.subr.mxu0 0.0
      %633 = vmatpush1.msra.mxu0 0.0
      %634 = vmatprep.subr.mxu0 0.0
      %635 = vmatpush1.msra.mxu0 0.0
      %636 = vmatprep.subr.mxu0 0.0
      %637 = vmatpush1.msra.mxu0 0.0
      %638 = vmatprep.subr.mxu0 0.0
      %639 = vmatpush1.msra.mxu0 0.0
      %640 = vmatprep.subr.mxu0 0.0
      %641 = vmatpush1.msra.mxu0 0.0
      %642 = vmatprep.subr.mxu0 0.0
      %643 = vmatpush1.msra.mxu0 0.0
      %644 = vmatprep.subr.mxu0 0.0
      %645 = vmatpush1.msra.mxu0 0.0
      %646 = vmatprep.subr.mxu0 0.0
      %647 = vmatpush1.msra.mxu0 0.0
      %648 = vmatprep.subr.mxu0 0.0
      %649 = vmatpush1.msra.mxu0 0.0
      %650 = vmatprep.subr.mxu0 0.0
      %651 = vmatpush1.msra.mxu0 0.0
      %652 = vmatprep.subr.mxu0 0.0
      %653 = vmatpush1.msra.mxu0 0.0
      %654 = vmatprep.subr.mxu0 0.0
      %655 = vmatpush1.msra.mxu0 0.0
      %656 = vmatprep.subr.mxu0 0.0
      %657 = vmatpush1.msra.mxu0 0.0
      %658 = vmatprep.subr.mxu0 0.0
      %659 = vmatpush1.msra.mxu0 0.0
      %660 = vmatprep.subr.mxu0 0.0
      %661 = vmatpush1.msra.mxu0 0.0
      %662 = vmatprep.subr.mxu0 0.0
      %663 = vmatpush1.msra.mxu0 0.0
      %664 = vmatprep.subr.mxu0 0.0
      %665 = vmatpush1.msra.mxu0 0.0
      %666 = vmatprep.subr.mxu0 0.0
      %667 = vmatpush1.msra.mxu0 0.0
      %668 = vmatprep.subr.mxu0 0.0
      %669 = vmatpush1.msra.mxu0 0.0
      %670 = vmatprep.subr.mxu0 0.0
      %671 = vmatpush1.msra.mxu0 0.0
      %672 = vmatprep.subr.mxu0 0.0
      %673 = vmatpush1.msra.mxu0 0.0
      %674 = vmatprep.subr.mxu0 0.0
      %675 = vmatpush1.msra.mxu0 0.0
      %676 = vmatprep.subr.mxu0 0.0
      %677 = vmatpush1.msra.mxu0 0.0
      %678 = vmatprep.subr.mxu0 0.0
      %679 = vmatpush1.msra.mxu0 0.0
      %680 = vmatprep.subr.mxu0 0.0
      %681 = vmatpush1.msra.mxu0 0.0
      %682 = vmatprep.subr.mxu0 0.0
      %683 = vmatpush1.msra.mxu0 0.0
      %684 = vmatprep.subr.mxu0 0.0
      %685 = vmatpush1.msra.mxu0 0.0
      %686 = vmatprep.subr.mxu0 0.0
      %687 = vmatpush1.msra.mxu0 0.0
      %688 = vmatprep.subr.mxu0 0.0
      %689 = vmatpush1.msra.mxu0 0.0
      %690 = vmatprep.subr.mxu0 0.0
      %691 = vmatpush1.msra.mxu0 0.0
      %692 = vmatprep.subr.mxu0 0.0
      %693 = vmatpush1.msra.mxu0 0.0
      %694 = vmatprep.mubr.f32.mxu0 0.0
      %695 = vmatmul.mubr.f32.gmra.mrb[0].mxu0 %v628
      %v696 = vpop.f32.mrb[0].mxu0
      %v697 = vadd.f32 0.0, %v696
      %v698 = vpop.f32.mrb[0].mxu0
      %699 = vdwg.mxu0
      %v701 = vsel %vm535, %v697, 0
      %703 = vmatprep.subr.mxu0 0.0
      %704 = vmatpush1.msra.mxu0 %v527
      %705 = vmatprep.subr.mxu0 0.0
      %706 = vmatpush1.msra.mxu0 %v528
      %707 = vmatprep.subr.mxu0 0.0
      %708 = vmatpush1.msra.mxu0 0.0
      %709 = vmatprep.subr.mxu0 0.0
      %710 = vmatpush1.msra.mxu0 0.0
      %711 = vmatprep.subr.mxu0 0.0
      %712 = vmatpush1.msra.mxu0 0.0
      %713 = vmatprep.subr.mxu0 0.0
      %714 = vmatpush1.msra.mxu0 0.0
      %715 = vmatprep.subr.mxu0 0.0
      %716 = vmatpush1.msra.mxu0 0.0
      %717 = vmatprep.subr.mxu0 0.0
      %718 = vmatpush1.msra.mxu0 0.0
      %719 = vmatprep.subr.mxu0 0.0
      %720 = vmatpush1.msra.mxu0 0.0
      %721 = vmatprep.subr.mxu0 0.0
      %722 = vmatpush1.msra.mxu0 0.0
      %723 = vmatprep.subr.mxu0 0.0
      %724 = vmatpush1.msra.mxu0 0.0
      %725 = vmatprep.subr.mxu0 0.0
      %726 = vmatpush1.msra.mxu0 0.0
      %727 = vmatprep.subr.mxu0 0.0
      %728 = vmatpush1.msra.mxu0 0.0
      %729 = vmatprep.subr.mxu0 0.0
      %730 = vmatpush1.msra.mxu0 0.0
      %731 = vmatprep.subr.mxu0 0.0
      %732 = vmatpush1.msra.mxu0 0.0
      %733 = vmatprep.subr.mxu0 0.0
      %734 = vmatpush1.msra.mxu0 0.0
      %735 = vmatprep.subr.mxu0 0.0
      %736 = vmatpush1.msra.mxu0 0.0
      %737 = vmatprep.subr.mxu0 0.0
      %738 = vmatpush1.msra.mxu0 0.0
      %739 = vmatprep.subr.mxu0 0.0
      %740 = vmatpush1.msra.mxu0 0.0
      %741 = vmatprep.subr.mxu0 0.0
      %742 = vmatpush1.msra.mxu0 0.0
      %743 = vmatprep.subr.mxu0 0.0
      %744 = vmatpush1.msra.mxu0 0.0
      %745 = vmatprep.subr.mxu0 0.0
      %746 = vmatpush1.msra.mxu0 0.0
      %747 = vmatprep.subr.mxu0 0.0
      %748 = vmatpush1.msra.mxu0 0.0
      %749 = vmatprep.subr.mxu0 0.0
      %750 = vmatpush1.msra.mxu0 0.0
      %751 = vmatprep.subr.mxu0 0.0
      %752 = vmatpush1.msra.mxu0 0.0
      %753 = vmatprep.subr.mxu0 0.0
      %754 = vmatpush1.msra.mxu0 0.0
      %755 = vmatprep.subr.mxu0 0.0
      %756 = vmatpush1.msra.mxu0 0.0
      %757 = vmatprep.subr.mxu0 0.0
      %758 = vmatpush1.msra.mxu0 0.0
      %759 = vmatprep.subr.mxu0 0.0
      %760 = vmatpush1.msra.mxu0 0.0
      %761 = vmatprep.subr.mxu0 0.0
      %762 = vmatpush1.msra.mxu0 0.0
      %763 = vmatprep.subr.mxu0 0.0
      %764 = vmatpush1.msra.mxu0 0.0
      %765 = vmatprep.subr.mxu0 0.0
      %766 = vmatpush1.msra.mxu0 0.0
      %767 = vmatprep.mubr.f32.mxu0 0.0
      %768 = vmatmul.mubr.f32.gmra.mrb[0].mxu0 %v701
      %v769 = vpop.f32.mrb[0].mxu0
      %v770 = vadd.f32 0.0, %v769
      %v771 = vpop.f32.mrb[0].mxu0
      %772 = vdwg.mxu0
      %v774 = vlaneseq
      %v775 = vshrl.u32 %v774, 7
      %v776 = vsub.s32 0, %v775
      %v777 = vrot.slane %v531, %v776
      %v779 = vadd.f32 %v777, %v770
      %780 = vrot.lane.b32.xlu0 %v519, 112
      %v781 = vpop.permute.xlu0 %780
      %782 = vrot.lane.b32.xlu0 %v519, 80
      %v783 = vpop.permute.xlu0 %782
      %v784 = vsel %vm535, %v781, 0
      %v786 = vsel %vm535, %v783, 0
      %788 = vmatprep.subr.mxu0 0.0
      %789 = vmatpush1.xpose.msra.mxu0 %v786
      %790 = vmatprep.subr.mxu0 0.0
      %791 = vmatpush1.xpose.msra.mxu0 0.0
      %792 = vmatprep.subr.mxu0 0.0
      %793 = vmatpush1.xpose.msra.mxu0 0.0
      %794 = vmatprep.subr.mxu0 0.0
      %795 = vmatpush1.xpose.msra.mxu0 0.0
      %796 = vmatprep.subr.mxu0 0.0
      %797 = vmatpush1.xpose.msra.mxu0 0.0
      %798 = vmatprep.subr.mxu0 0.0
      %799 = vmatpush1.xpose.msra.mxu0 0.0
      %800 = vmatprep.subr.mxu0 0.0
      %801 = vmatpush1.xpose.msra.mxu0 0.0
      %802 = vmatprep.subr.mxu0 0.0
      %803 = vmatpush1.xpose.msra.mxu0 0.0
      %804 = vmatprep.subr.mxu0 0.0
      %805 = vmatpush1.xpose.msra.mxu0 0.0
      %806 = vmatprep.subr.mxu0 0.0
      %807 = vmatpush1.xpose.msra.mxu0 0.0
      %808 = vmatprep.subr.mxu0 0.0
      %809 = vmatpush1.xpose.msra.mxu0 0.0
      %810 = vmatprep.subr.mxu0 0.0
      %811 = vmatpush1.xpose.msra.mxu0 0.0
      %812 = vmatprep.subr.mxu0 0.0
      %813 = vmatpush1.xpose.msra.mxu0 0.0
      %814 = vmatprep.subr.mxu0 0.0
      %815 = vmatpush1.xpose.msra.mxu0 0.0
      %816 = vmatprep.subr.mxu0 0.0
      %817 = vmatpush1.xpose.msra.mxu0 0.0
      %818 = vmatprep.subr.mxu0 0.0
      %819 = vmatpush1.xpose.msra.mxu0 0.0
      %820 = vmatprep.subr.mxu0 0.0
      %821 = vmatpush1.xpose.msra.mxu0 0.0
      %822 = vmatprep.subr.mxu0 0.0
      %823 = vmatpush1.xpose.msra.mxu0 0.0
      %824 = vmatprep.subr.mxu0 0.0
      %825 = vmatpush1.xpose.msra.mxu0 0.0
      %826 = vmatprep.subr.mxu0 0.0
      %827 = vmatpush1.xpose.msra.mxu0 0.0
      %828 = vmatprep.subr.mxu0 0.0
      %829 = vmatpush1.xpose.msra.mxu0 0.0
      %830 = vmatprep.subr.mxu0 0.0
      %831 = vmatpush1.xpose.msra.mxu0 0.0
      %832 = vmatprep.subr.mxu0 0.0
      %833 = vmatpush1.xpose.msra.mxu0 0.0
      %834 = vmatprep.subr.mxu0 0.0
      %835 = vmatpush1.xpose.msra.mxu0 0.0
      %836 = vmatprep.subr.mxu0 0.0
      %837 = vmatpush1.xpose.msra.mxu0 0.0
      %838 = vmatprep.subr.mxu0 0.0
      %839 = vmatpush1.xpose.msra.mxu0 0.0
      %840 = vmatprep.subr.mxu0 0.0
      %841 = vmatpush1.xpose.msra.mxu0 0.0
      %842 = vmatprep.subr.mxu0 0.0
      %843 = vmatpush1.xpose.msra.mxu0 0.0
      %844 = vmatprep.subr.mxu0 0.0
      %845 = vmatpush1.xpose.msra.mxu0 0.0
      %846 = vmatprep.subr.mxu0 0.0
      %847 = vmatpush1.xpose.msra.mxu0 0.0
      %848 = vmatprep.subr.mxu0 0.0
      %849 = vmatpush1.xpose.msra.mxu0 0.0
      %850 = vmatprep.subr.mxu0 0.0
      %851 = vmatpush1.xpose.msra.mxu0 0.0
      %852 = vmatprep.mubr.f32.mxu0 0.0
      %853 = vmatmul.mubr.f32.gmra.mrb[0].mxu0 %v784
      %v854 = vpop.f32.mrb[0].mxu0
      %v855 = vadd.f32 0.0, %v854
      %v856 = vpop.f32.mrb[0].mxu0
      %857 = vdwg.mxu0
      %v858 = vmul.f32 %v855, 0.25
      %v859 = vsel %vm526, %v858, -1e+30
      %v860 = vsel %vm612, %v859, -inf
      %861 = vmax.xlane.f32.xlu0 %v860
      %v862 = vpop.xlane.xlu0 %861
      %v863 = vsub.f32 %v859, %v862
      %v864 = vmul.f32 %v863, 1.442695
      %v865 = vpow.pop %v864
      %v866 = vsel %vm612, %v865, 0.0
      %867 = vadd.xlane.f32.xlu0 %v866
      %v868 = vpop.xlane.xlu0 %867
      %v869 = vrcp.pop %v868
      %v870 = vmul.f32 %v865, %v869
      %871 = vrot.lane.b32.xlu0 %v519, 48
      %v872 = vpop.permute.xlu0 %871
      %v875 = vsel %vm612, %v870, 0
      %877 = vmatprep.subr.mxu0 0.0
      %878 = vmatpush1.msra.mxu0 %v872
      %879 = vmatprep.subr.mxu0 0.0
      %880 = vmatpush1.msra.mxu0 0.0
      %881 = vmatprep.subr.mxu0 0.0
      %882 = vmatpush1.msra.mxu0 0.0
      %883 = vmatprep.subr.mxu0 0.0
      %884 = vmatpush1.msra.mxu0 0.0
      %885 = vmatprep.subr.mxu0 0.0
      %886 = vmatpush1.msra.mxu0 0.0
      %887 = vmatprep.subr.mxu0 0.0
      %888 = vmatpush1.msra.mxu0 0.0
      %889 = vmatprep.subr.mxu0 0.0
      %890 = vmatpush1.msra.mxu0 0.0
      %891 = vmatprep.subr.mxu0 0.0
      %892 = vmatpush1.msra.mxu0 0.0
      %893 = vmatprep.subr.mxu0 0.0
      %894 = vmatpush1.msra.mxu0 0.0
      %895 = vmatprep.subr.mxu0 0.0
      %896 = vmatpush1.msra.mxu0 0.0
      %897 = vmatprep.subr.mxu0 0.0
      %898 = vmatpush1.msra.mxu0 0.0
      %899 = vmatprep.subr.mxu0 0.0
      %900 = vmatpush1.msra.mxu0 0.0
      %901 = vmatprep.subr.mxu0 0.0
      %902 = vmatpush1.msra.mxu0 0.0
      %903 = vmatprep.subr.mxu0 0.0
      %904 = vmatpush1.msra.mxu0 0.0
      %905 = vmatprep.subr.mxu0 0.0
      %906 = vmatpush1.msra.mxu0 0.0
      %907 = vmatprep.subr.mxu0 0.0
      %908 = vmatpush1.msra.mxu0 0.0
      %909 = vmatprep.subr.mxu0 0.0
      %910 = vmatpush1.msra.mxu0 0.0
      %911 = vmatprep.subr.mxu0 0.0
      %912 = vmatpush1.msra.mxu0 0.0
      %913 = vmatprep.subr.mxu0 0.0
      %914 = vmatpush1.msra.mxu0 0.0
      %915 = vmatprep.subr.mxu0 0.0
      %916 = vmatpush1.msra.mxu0 0.0
      %917 = vmatprep.subr.mxu0 0.0
      %918 = vmatpush1.msra.mxu0 0.0
      %919 = vmatprep.subr.mxu0 0.0
      %920 = vmatpush1.msra.mxu0 0.0
      %921 = vmatprep.subr.mxu0 0.0
      %922 = vmatpush1.msra.mxu0 0.0
      %923 = vmatprep.subr.mxu0 0.0
      %924 = vmatpush1.msra.mxu0 0.0
      %925 = vmatprep.subr.mxu0 0.0
      %926 = vmatpush1.msra.mxu0 0.0
      %927 = vmatprep.subr.mxu0 0.0
      %928 = vmatpush1.msra.mxu0 0.0
      %929 = vmatprep.subr.mxu0 0.0
      %930 = vmatpush1.msra.mxu0 0.0
      %931 = vmatprep.subr.mxu0 0.0
      %932 = vmatpush1.msra.mxu0 0.0
      %933 = vmatprep.subr.mxu0 0.0
      %934 = vmatpush1.msra.mxu0 0.0
      %935 = vmatprep.subr.mxu0 0.0
      %936 = vmatpush1.msra.mxu0 0.0
      %937 = vmatprep.subr.mxu0 0.0
      %938 = vmatpush1.msra.mxu0 0.0
      %939 = vmatprep.subr.mxu0 0.0
      %940 = vmatpush1.msra.mxu0 0.0
      %941 = vmatprep.mubr.f32.mxu0 0.0
      %942 = vmatmul.mubr.f32.gmra.mrb[0].mxu0 %v875
      %v943 = vpop.f32.mrb[0].mxu0
      %v944 = vadd.f32 0.0, %v943
      %v945 = vpop.f32.mrb[0].mxu0
      %946 = vdwg.mxu0
      %v948 = vsel %vm535, %v944, 0
      %950 = vmatprep.subr.mxu0 0.0
      %951 = vmatpush1.msra.mxu0 %v529
      %952 = vmatprep.subr.mxu0 0.0
      %953 = vmatpush1.msra.mxu0 %v530
      %954 = vmatprep.subr.mxu0 0.0
      %955 = vmatpush1.msra.mxu0 0.0
      %956 = vmatprep.subr.mxu0 0.0
      %957 = vmatpush1.msra.mxu0 0.0
      %958 = vmatprep.subr.mxu0 0.0
      %959 = vmatpush1.msra.mxu0 0.0
      %960 = vmatprep.subr.mxu0 0.0
      %961 = vmatpush1.msra.mxu0 0.0
      %962 = vmatprep.subr.mxu0 0.0
      %963 = vmatpush1.msra.mxu0 0.0
      %964 = vmatprep.subr.mxu0 0.0
      %965 = vmatpush1.msra.mxu0 0.0
      %966 = vmatprep.subr.mxu0 0.0
      %967 = vmatpush1.msra.mxu0 0.0
      %968 = vmatprep.subr.mxu0 0.0
      %969 = vmatpush1.msra.mxu0 0.0
      %970 = vmatprep.subr.mxu0 0.0
      %971 = vmatpush1.msra.mxu0 0.0
      %972 = vmatprep.subr.mxu0 0.0
      %973 = vmatpush1.msra.mxu0 0.0
      %974 = vmatprep.subr.mxu0 0.0
      %975 = vmatpush1.msra.mxu0 0.0
      %976 = vmatprep.subr.mxu0 0.0
      %977 = vmatpush1.msra.mxu0 0.0
      %978 = vmatprep.subr.mxu0 0.0
      %979 = vmatpush1.msra.mxu0 0.0
      %980 = vmatprep.subr.mxu0 0.0
      %981 = vmatpush1.msra.mxu0 0.0
      %982 = vmatprep.subr.mxu0 0.0
      %983 = vmatpush1.msra.mxu0 0.0
      %984 = vmatprep.subr.mxu0 0.0
      %985 = vmatpush1.msra.mxu0 0.0
      %986 = vmatprep.subr.mxu0 0.0
      %987 = vmatpush1.msra.mxu0 0.0
      %988 = vmatprep.subr.mxu0 0.0
      %989 = vmatpush1.msra.mxu0 0.0
      %990 = vmatprep.subr.mxu0 0.0
      %991 = vmatpush1.msra.mxu0 0.0
      %992 = vmatprep.subr.mxu0 0.0
      %993 = vmatpush1.msra.mxu0 0.0
      %994 = vmatprep.subr.mxu0 0.0
      %995 = vmatpush1.msra.mxu0 0.0
      %996 = vmatprep.subr.mxu0 0.0
      %997 = vmatpush1.msra.mxu0 0.0
      %998 = vmatprep.subr.mxu0 0.0
      %999 = vmatpush1.msra.mxu0 0.0
      %1000 = vmatprep.subr.mxu0 0.0
      %1001 = vmatpush1.msra.mxu0 0.0
      %1002 = vmatprep.subr.mxu0 0.0
      %1003 = vmatpush1.msra.mxu0 0.0
      %1004 = vmatprep.subr.mxu0 0.0
      %1005 = vmatpush1.msra.mxu0 0.0
      %1006 = vmatprep.subr.mxu0 0.0
      %1007 = vmatpush1.msra.mxu0 0.0
      %1008 = vmatprep.subr.mxu0 0.0
      %1009 = vmatpush1.msra.mxu0 0.0
      %1010 = vmatprep.subr.mxu0 0.0
      %1011 = vmatpush1.msra.mxu0 0.0
      %1012 = vmatprep.subr.mxu0 0.0
      %1013 = vmatpush1.msra.mxu0 0.0
      %1014 = vmatprep.mubr.f32.mxu0 0.0
      %1015 = vmatmul.mubr.f32.gmra.mrb[0].mxu0 %v948
      %v1016 = vpop.f32.mrb[0].mxu0
      %v1017 = vadd.f32 0.0, %v1016
      %v1018 = vpop.f32.mrb[0].mxu0
      %1019 = vdwg.mxu0
      %v1020 = vadd.f32 %v779, %v1017
      %v1021 = vadd.f32 %v436, %v1020
      %v1022 = vld [vmem:[%s5] sm:$0x1]
      %v1023 = vld [vmem:[%s6] sm:$0x1]
      %v1024 = vsel %vm448, %v1021, 0.0
      %1025 = vadd.xlane.f32.xlu0 %v1024
      %v1026 = vpop.xlane.xlu0 %1025
      %v1027 = vrcp.pop 32.0
      %v1028 = vmul.f32 %v1026, %v1027
      %v1029 = vsub.f32 %v1021, %v1028
      %v1030 = vmul.f32 %v1029, %v1029
      %v1031 = vsel %vm448, %v1030, 0.0
      %1032 = vadd.xlane.f32.xlu0 %v1031
      %v1033 = vpop.xlane.xlu0 %1032
      %v1034 = vmul.f32 %v1033, %v1027
      %v1035 = vadd.f32 %v1034, 1e-05
      %v1036 = vrsqrt.pop %v1035
      %v1037 = vmul.f32 %v1029, %v1036
      %v1039 = vlaneseq
      %v1040 = vshrl.u32 %v1039, 7
      %v1041 = vsub.s32 0, %v1040
      %v1042 = vrot.slane %v1022, %v1041
      %v1044 = vmul.f32 %v1037, %v1042
      %v1046 = vlaneseq
      %v1047 = vshrl.u32 %v1046, 7
      %v1048 = vsub.s32 0, %v1047
      %v1049 = vrot.slane %v1023, %v1048
      %v1051 = vadd.f32 %v1044, %v1049
      %v1052 = vld [vmem:[%s7] sm:$0xff]
      %v1053 = vld [vmem:[%s7 + $0x8] sm:$0xff]
      %v1054 = vld [vmem:[%s7 + $0x10] sm:$0xff]
      %v1055 = vld [vmem:[%s7 + $0x18] sm:$0xff]
      %v1056 = vld [vmem:[%s8] sm:$0x1]
      %v1058 = vlaneseq
      %v1059 = vshrl.u32 %v1058, 7
      %v1060 = vsub.s32 0, %v1059
      %v1061 = vrot.slane %v1056, %v1060
      %v1064 = vsel %vm448, %v1051, 0
      %1066 = vmatprep.subr.mxu0 0.0
      %1067 = vmatpush1.msra.mxu0 %v1052
      %1068 = vmatprep.subr.mxu0 0.0
      %1069 = vmatpush1.msra.mxu0 %v1053
      %1070 = vmatprep.subr.mxu0 0.0
      %1071 = vmatpush1.msra.mxu0 %v1054
      %1072 = vmatprep.subr.mxu0 0.0
      %1073 = vmatpush1.msra.mxu0 %v1055
      %1074 = vmatprep.subr.mxu0 0.0
      %1075 = vmatpush1.msra.mxu0 0.0
      %1076 = vmatprep.subr.mxu0 0.0
      %1077 = vmatpush1.msra.mxu0 0.0
      %1078 = vmatprep.subr.mxu0 0.0
      %1079 = vmatpush1.msra.mxu0 0.0
      %1080 = vmatprep.subr.mxu0 0.0
      %1081 = vmatpush1.msra.mxu0 0.0
      %1082 = vmatprep.subr.mxu0 0.0
      %1083 = vmatpush1.msra.mxu0 0.0
      %1084 = vmatprep.subr.mxu0 0.0
      %1085 = vmatpush1.msra.mxu0 0.0
      %1086 = vmatprep.subr.mxu0 0.0
      %1087 = vmatpush1.msra.mxu0 0.0
      %1088 = vmatprep.subr.mxu0 0.0
      %1089 = vmatpush1.msra.mxu0 0.0
      %1090 = vmatprep.subr.mxu0 0.0
      %1091 = vmatpush1.msra.mxu0 0.0
      %1092 = vmatprep.subr.mxu0 0.0
      %1093 = vmatpush1.msra.mxu0 0.0
      %1094 = vmatprep.subr.mxu0 0.0
      %1095 = vmatpush1.msra.mxu0 0.0
      %1096 = vmatprep.subr.mxu0 0.0
      %1097 = vmatpush1.msra.mxu0 0.0
      %1098 = vmatprep.subr.mxu0 0.0
      %1099 = vmatpush1.msra.mxu0 0.0
      %1100 = vmatprep.subr.mxu0 0.0
      %1101 = vmatpush1.msra.mxu0 0.0
      %1102 = vmatprep.subr.mxu0 0.0
      %1103 = vmatpush1.msra.mxu0 0.0
      %1104 = vmatprep.subr.mxu0 0.0
      %1105 = vmatpush1.msra.mxu0 0.0
      %1106 = vmatprep.subr.mxu0 0.0
      %1107 = vmatpush1.msra.mxu0 0.0
      %1108 = vmatprep.subr.mxu0 0.0
      %1109 = vmatpush1.msra.mxu0 0.0
      %1110 = vmatprep.subr.mxu0 0.0
      %1111 = vmatpush1.msra.mxu0 0.0
      %1112 = vmatprep.subr.mxu0 0.0
      %1113 = vmatpush1.msra.mxu0 0.0
      %1114 = vmatprep.subr.mxu0 0.0
      %1115 = vmatpush1.msra.mxu0 0.0
      %1116 = vmatprep.subr.mxu0 0.0
      %1117 = vmatpush1.msra.mxu0 0.0
      %1118 = vmatprep.subr.mxu0 0.0
      %1119 = vmatpush1.msra.mxu0 0.0
      %1120 = vmatprep.subr.mxu0 0.0
      %1121 = vmatpush1.msra.mxu0 0.0
      %1122 = vmatprep.subr.mxu0 0.0
      %1123 = vmatpush1.msra.mxu0 0.0
      %1124 = vmatprep.subr.mxu0 0.0
      %1125 = vmatpush1.msra.mxu0 0.0
      %1126 = vmatprep.subr.mxu0 0.0
      %1127 = vmatpush1.msra.mxu0 0.0
      %1128 = vmatprep.subr.mxu0 0.0
      %1129 = vmatpush1.msra.mxu0 0.0
      %1130 = vmatprep.mubr.f32.mxu0 0.0
      %1131 = vmatmul.mubr.f32.gmra.mrb[0].mxu0 %v1064
      %v1132 = vpop.f32.mrb[0].mxu0
      %v1133 = vadd.f32 %v1061, %v1132
      %v1134 = vpop.f32.mrb[0].mxu0
      %1135 = vdwg.mxu0
      %v1136 = vmul.f32 %v1133, 0.5
      %v1137 = vmul.f32 %v1133, 0.70710677
      %v1138 = verf.f32.pop %v1137
      %v1139 = vadd.f32 %v1138, 1.0
      %v1140 = vmul.f32 %v1136, %v1139
      %v1141 = vld [vmem:[%s9] sm:$0xff]
      %v1142 = vld [vmem:[%s9 + $0x8] sm:$0xff]
      %v1143 = vld [vmem:[%s9 + $0x10] sm:$0xff]
      %v1144 = vld [vmem:[%s9 + $0x18] sm:$0xff]
      %v1145 = vld [vmem:[%s10] sm:$0x1]
      %v1147 = vlaneseq
      %v1148 = vshrl.u32 %v1147, 7
      %v1149 = vsub.s32 0, %v1148
      %v1150 = vrot.slane %v1145, %v1149
      %v1153 = vsel %vm448, %v1140, 0
      %1155 = vmatprep.subr.mxu0 0.0
      %1156 = vmatpush1.msra.mxu0 %v1141
      %1157 = vmatprep.subr.mxu0 0.0
      %1158 = vmatpush1.msra.mxu0 %v1142
      %1159 = vmatprep.subr.mxu0 0.0
      %1160 = vmatpush1.msra.mxu0 %v1143
      %1161 = vmatprep.subr.mxu0 0.0
      %1162 = vmatpush1.msra.mxu0 %v1144
      %1163 = vmatprep.subr.mxu0 0.0
      %1164 = vmatpush1.msra.mxu0 0.0
      %1165 = vmatprep.subr.mxu0 0.0
      %1166 = vmatpush1.msra.mxu0 0.0
      %1167 = vmatprep.subr.mxu0 0.0
      %1168 = vmatpush1.msra.mxu0 0.0
      %1169 = vmatprep.subr.mxu0 0.0
      %1170 = vmatpush1.msra.mxu0 0.0
      %1171 = vmatprep.subr.mxu0 0.0
      %1172 = vmatpush1.msra.mxu0 0.0
      %1173 = vmatprep.subr.mxu0 0.0
      %1174 = vmatpush1.msra.mxu0 0.0
      %1175 = vmatprep.subr.mxu0 0.0
      %1176 = vmatpush1.msra.mxu0 0.0
      %1177 = vmatprep.subr.mxu0 0.0
      %1178 = vmatpush1.msra.mxu0 0.0
      %1179 = vmatprep.subr.mxu0 0.0
      %1180 = vmatpush1.msra.mxu0 0.0
      %1181 = vmatprep.subr.mxu0 0.0
      %1182 = vmatpush1.msra.mxu0 0.0
      %1183 = vmatprep.subr.mxu0 0.0
      %1184 = vmatpush1.msra.mxu0 0.0
      %1185 = vmatprep.subr.mxu0 0.0
      %1186 = vmatpush1.msra.mxu0 0.0
      %1187 = vmatprep.subr.mxu0 0.0
      %1188 = vmatpush1.msra.mxu0 0.0
      %1189 = vmatprep.subr.mxu0 0.0
      %1190 = vmatpush1.msra.mxu0 0.0
      %1191 = vmatprep.subr.mxu0 0.0
      %1192 = vmatpush1.msra.mxu0 0.0
      %1193 = vmatprep.subr.mxu0 0.0
      %1194 = vmatpush1.msra.mxu0 0.0
      %1195 = vmatprep.subr.mxu0 0.0
      %1196 = vmatpush1.msra.mxu0 0.0
      %1197 = vmatprep.subr.mxu0 0.0
      %1198 = vmatpush1.msra.mxu0 0.0
      %1199 = vmatprep.subr.mxu0 0.0
      %1200 = vmatpush1.msra.mxu0 0.0
      %1201 = vmatprep.subr.mxu0 0.0
      %1202 = vmatpush1.msra.mxu0 0.0
      %1203 = vmatprep.subr.mxu0 0.0
      %1204 = vmatpush1.msra.mxu0 0.0
      %1205 = vmatprep.subr.mxu0 0.0
      %1206 = vmatpush1.msra.mxu0 0.0
      %1207 = vmatprep.subr.mxu0 0.0
      %1208 = vmatpush1.msra.mxu0 0.0
      %1209 = vmatprep.subr.mxu0 0.0
      %1210 = vmatpush1.msra.mxu0 0.0
      %1211 = vmatprep.subr.mxu0 0.0
      %1212 = vmatpush1.msra.mxu0 0.0
      %1213 = vmatprep.subr.mxu0 0.0
      %1214 = vmatpush1.msra.mxu0 0.0
      %1215 = vmatprep.subr.mxu0 0.0
      %1216 = vmatpush1.msra.mxu0 0.0
      %1217 = vmatprep.subr.mxu0 0.0
      %1218 = vmatpush1.msra.mxu0 0.0
      %1219 = vmatprep.mubr.f32.mxu0 0.0
      %1220 = vmatmul.mubr.f32.gmra.mrb[0].mxu0 %v1153
      %v1221 = vpop.f32.mrb[0].mxu0
      %v1222 = vadd.f32 %v1150, %v1221
      %v1223 = vpop.f32.mrb[0].mxu0
      %1224 = vdwg.mxu0
      %v1225 = vadd.f32 %v1051, %v1222
      %v1226 = vld [vmem:[%s11] sm:$0x1]
      %v1227 = vld [vmem:[%s12] sm:$0x1]
      %v1228 = vsel %vm448, %v1225, 0.0
      %1229 = vadd.xlane.f32.xlu0 %v1228
      %v1230 = vpop.xlane.xlu0 %1229
      %v1231 = vmul.f32 %v1230, %v1027
      %v1232 = vsub.f32 %v1225, %v1231
      %v1233 = vmul.f32 %v1232, %v1232
      %v1234 = vsel %vm448, %v1233, 0.0
      %1235 = vadd.xlane.f32.xlu0 %v1234
      %v1236 = vpop.xlane.xlu0 %1235
      %v1237 = vmul.f32 %v1236, %v1027
      %v1238 = vadd.f32 %v1237, 1e-05
      %v1239 = vrsqrt.pop %v1238
      %v1240 = vmul.f32 %v1232, %v1239
      %v1242 = vlaneseq
      %v1243 = vshrl.u32 %v1242, 7
      %v1244 = vsub.s32 0, %v1243
      %v1245 = vrot.slane %v1226, %v1244
      %v1247 = vmul.f32 %v1240, %v1245
      %v1249 = vlaneseq
      %v1250 = vshrl.u32 %v1249, 7
      %v1251 = vsub.s32 0, %v1250
      %v1252 = vrot.slane %v1227, %v1251
      %v1254 = vadd.f32 %v1247, %v1252
      %1255 = vst.msk [vmem:[%s435] sm:$0xff] %vm448, %v1254
      %p1256 = scmp.lt.s32.totalorder %s24, 1
      %s1257 = scalar_select %p1256, %s24, 1
      %s1258 = smul.addr %s1257, 8
      %s1259 = scalar_lea.vmem %s13, %s1258
      // Predicated region
      $region73: #{transformer_link_forward.5} parent=71 // pred_check
        %p1260 = pneg %p320
      $region74: #{transformer_link_forward.5} parent=71 // pred_check_branch
        %1262 = sbr.rel (%p1260) target = $region76
      $region75: #{transformer_link_forward.5} parent=71 // pred_region
        _
      $region76: #{transformer_link_forward.5} parent=71 // pred_fallthru
        _
    $region72: #{transformer_link_forward.5} parent=5 // pred_fallthru
      _
    %p1263 = scmp.le.s32.totalorder 2, %s19
    // Predicated region
    $region77: #{transformer_link_forward.5} parent=5 // pred_check
      %p1264 = pneg %p1263
    $region78: #{transformer_link_forward.5} parent=5 // pred_check_branch
      %1266 = sbr.rel (%p1264) target = $region80
    $region79: #{transformer_link_forward.5} parent=5 // pred_region
      %s1267 = ssub.s32 %s19, 2
      // Predicated region
      $region81: #{transformer_link_forward.5} parent=79 // pred_check
        %p1268 = pneg %p326
      $region82: #{transformer_link_forward.5} parent=79 // pred_check_branch
        %1270 = sbr.rel (%p1268) target = $region84
      $region83: #{transformer_link_forward.5} parent=79 // pred_region
        %p1271 = scmp.lt.s32.totalorder %s25, 1
        %s1272 = scalar_select %p1271, %s25, 1
        %s1273 = smul.addr %s1272, 8
        %s1274 = scalar_lea.vmem %s13, %s1273
      $region84: #{transformer_link_forward.5} parent=79 // pred_fallthru
        _
    $region80: #{transformer_link_forward.5} parent=5 // pred_fallthru
      _
  $region6: #{transformer_link_forward.5} parent=0 // loop_footer
    %s23 = sadd.s32 1, %s19
  $region7: #{transformer_link_forward.5} parent=0 // loop_footer_branch
    %18 = sbr.rel target = $region3
  $region8: #{transformer_link_forward.5} parent=0 // loop_exit
    _

</llo_original>
